<compile_context>
chip_gen: v7x
topology: tpu7x:2x2x1
jax: 0.10.0
libtpu: 0.0.40
codegen_flags: <defaults>
</compile_context>

<pallas_src>
import functools

import jax
import jax.numpy as jnp
from jax.experimental import pallas as pl
from jax.experimental.pallas import tpu as pltpu


_PACK = 128          # lane-dense packed-output width (multiple of 128 -> dense stores)


# ----------------------------------------------------------------------------
# small helpers (wrapper side)
# ----------------------------------------------------------------------------
def _round_up(x, m):
    return ((x + m - 1) // m) * m


def _vmem_capacity_bytes():
    try:
        return int(pltpu.get_tpu_info().vmem_capacity_bytes)
    except Exception:
        return 64 * 1024 * 1024          # conservative default (v7x per-core VMEM)


def _param_bytes(params):
    return sum(int(p.size) * p.dtype.itemsize for p in params)


def _select_tiling(B, M, S, H, Omax, param_bytes):
    """Generation-aware batch-tile / scoped-VMEM-limit selection."""
    cap = _vmem_capacity_bytes()
    # ~3/4 of physical VMEM, >= 8 MiB headroom: ~96 MiB on v5e/v6e, ~48 MiB on v7x.
    vmem_limit = max(32 << 20, min((cap * 3) // 4, cap - (8 << 20)))

    # Rough per-batch-row VMEM for intermediates: u (f32 + bf16 copy), hyper head,
    # h, w2_flat, plus double-buffered in/out tiles.  x2 for actor+critic bodies.
    row_bytes = 2 * (6 * S * H + 4 * (3 * H + Omax) + 4 * H + 6 * Omax * H) \
        + 8 * (M + S + Omax + _PACK)
    # Params are grid-invariant but the default pipeline still double-buffers them.
    budget = vmem_limit - 2 * param_bytes - (4 << 20)
    tb_max = max(8, min(1024, (max(budget, 8 * row_bytes) // row_bytes) // 8 * 8))

    Bp = _round_up(max(B, 8), 8)
    TB = min(tb_max, Bp)
    # v7x has 2 TensorCores sharing the "parallel" grid axis: guarantee >= 2 grid
    # steps whenever the batch allows it (costs only ~0.35us/step on 1-TC chips).
    if Bp >= 16:
        TB = min(TB, _round_up(Bp // 2, 8))
    Bp = _round_up(Bp, TB)
    return Bp, TB, int(vmem_limit)


def _compiler_params(vmem_limit):
    return pltpu.CompilerParams(
        dimension_semantics=("parallel",),     # batch axis -> both TCs on v7x
        vmem_limit_bytes=vmem_limit,
    )


def _pad_rows(x, Bp):
    B = x.shape[0]
    if B == Bp:
        return x
    return jnp.concatenate([x, jnp.zeros((Bp - B,) + x.shape[1:], x.dtype)], axis=0)


def _row_spec(TB, d):
    return pl.BlockSpec((TB, d), lambda i: (i, 0))


def _param_specs(params):
    # Hyper-net params are grid-invariant (constant index_map) so the pipeline
    # never re-fetches them; their default double-buffering is accounted for in
    # _select_tiling's VMEM budget.
    # TODO(synk): switch to pipeline_mode=pl.Buffered(1) to drop the second
    # (unused) param buffer once validated on the target jax/Mosaic version.
    return [pl.BlockSpec(p.shape, lambda i: (0, 0)) for p in params]


# ----------------------------------------------------------------------------
# in-kernel building blocks
# ----------------------------------------------------------------------------
def _hypernet_body(meta, state, S, H, O, wha, bha, w1p, b1p, w2b, b2b):
    """Per-tile hyper-network forward.

    meta: (TB, M) f32, state: (TB, S) f32.
    wha/bha : fused hyper heads [w1a | w2a | wb1 | wb2] -> (M, 3H+O) / (1, 3H+O), f32.
    w1p     : (S*H, H)  Khatri-Rao-permuted hyper_w1 output weight (bf16 or f32).
    b1p     : (S, H)    hyper_w1 output bias reshaped, f32.
    w2b/b2b : (H, O*H) / (1, O*H) hyper_w2 output weight/bias (w2b bf16 or f32).
    Returns (cols, h): cols is a list of O (TB, 1) output columns (bias added),
    h is the (TB, H) post-ReLU hidden activation.
    """
    # single fused hyper-head matmul (4 tiny K=M heads in one dot); kept f32.
    head = jnp.dot(meta, wha, preferred_element_type=jnp.float32) + bha    # (TB, 3H+O)
    z1 = jnp.maximum(head[:, 0:H], 0.0)
    z2 = jnp.maximum(head[:, H:2 * H], 0.0)
    b1 = head[:, 2 * H:3 * H]
    b2 = head[:, 3 * H:3 * H + O]

    # --- base-net layer 1 as ONE MXU matmul (Khatri-Rao reformulation) ---
    #   h = relu( u @ W1p + state @ B1p + b1 ),  u[:, s*H:(s+1)*H] = state[:,s]*z1
    u = jnp.concatenate([state[:, s:s + 1] * z1 for s in range(S)],
                        axis=-1).astype(w1p.dtype)                         # (TB, S*H)
    h = jnp.maximum(
        jnp.dot(u, w1p, preferred_element_type=jnp.float32)
        + jnp.dot(state, b1p, preferred_element_type=jnp.float32)
        + b1, 0.0)                                                          # (TB, H)

    # --- base-net layer 2: per-sample generated W2, O small -> VPU contraction ---
    w2_flat = jnp.dot(z2.astype(w2b.dtype), w2b,
                      preferred_element_type=jnp.float32) + b2b             # (TB, O*H)
    cols = [jnp.sum(h * w2_flat[:, o * H:(o + 1) * H], axis=-1, keepdims=True)
            + b2[:, o:o + 1] for o in range(O)]
    return cols, h


def _categorical_cols(cols, action):
    """Stable log-softmax log-prob + entropy over per-column logits (pure VPU).

    Two passes over `cols`; only a handful of (TB,1) temporaries stay live
    (no per-column zs/es lists), keeping narrow-column VMEM pressure low.
    """
    m = cols[0]
    for c in cols[1:]:
        m = jnp.maximum(m, c)
    se = jnp.exp(cols[0] - m)
    for c in cols[1:]:
        se = se + jnp.exp(c - m)
    lse = m + jnp.log(se)

    logp = jnp.zeros_like(m)
    ent = jnp.zeros_like(m)
    for o, c in enumerate(cols):
        lp = c - lse
        logp = logp + jnp.where(action == o, lp, 0.0)
        ent = ent - jnp.exp(lp) * lp
    return logp, ent


def _pack_lanes(cols, shape):
    """Pack a few (TB,1) columns into lanes [0..len-1] of a dense (TB, PACK) slab."""
    lane = jax.lax.broadcasted_iota(jnp.int32, shape, 1)
    slab = jnp.zeros(shape, jnp.float32)
    for o, c in enumerate(cols):
        slab = jnp.where(lane == o, c, slab)
    return slab                                   # written with ONE dense store


# ----------------------------------------------------------------------------
# Pallas kernels
# ----------------------------------------------------------------------------
def _hypernet_kernel(S, H, O, meta_ref, state_ref,
                     wha_ref, bha_ref, w1p_ref, b1p_ref, w2b_ref, b2b_ref,
                     out_ref, h_ref):
    """Standalone HyperNetwork forward: (out_slab, hidden)."""
    cols, h = _hypernet_body(meta_ref[...], state_ref[...], S, H, O,
                             wha_ref[...], bha_ref[...], w1p_ref[...], b1p_ref[...],
                             w2b_ref[...], b2b_ref[...])
    h_ref[...] = h
    out_ref[...] = _pack_lanes(cols, out_ref.shape)


def _evaluate_kernel(S, H, A, meta_ref, state_ref, act_ref,
                     a_wha, a_bha, a_w1p, a_b1p, a_w2b, a_b2b,
                     c_wha, c_bha, c_w1p, c_b1p, c_w2b, c_b2b,
                     out_ref):
    """actor + Categorical(log_prob, entropy) + critic fused in one call."""
    meta = meta_ref[...]
    state = state_ref[...]
    action = act_ref[...]                                                  # (TB, 1) i32

    logit_cols, _ = _hypernet_body(meta, state, S, H, A,
                                   a_wha[...], a_bha[...], a_w1p[...], a_b1p[...],
                                   a_w2b[...], a_b2b[...])
    logp, ent = _categorical_cols(logit_cols, action)

    value_cols, _ = _hypernet_body(meta, state, S, H, 1,
                                   c_wha[...], c_bha[...], c_w1p[...], c_b1p[...],
                                   c_w2b[...], c_b2b[...])

    # lanes: 0 -> logp, 1 -> value, 2 -> entropy; single dense store
    out_ref[...] = _pack_lanes([logp, value_cols[0], ent], out_ref.shape)


def _act_kernel(S, H, A, meta_ref, state_ref, gum_ref,
                a_wha, a_bha, a_w1p, a_b1p, a_w2b, a_b2b,
                out_ref):
    """actor + Gumbel-max sampling + log_prob fused in one call."""
    meta = meta_ref[...]
    state = state_ref[...]
    g = gum_ref[...]                                                       # (TB, A)

    logit_cols, _ = _hypernet_body(meta, state, S, H, A,
                                   a_wha[...], a_bha[...], a_w1p[...], a_b1p[...],
                                   a_w2b[...], a_b2b[...])

    best = logit_cols[0] + g[:, 0:1]
    best_idx = jnp.zeros_like(best)
    for o in range(1, A):
        sc = logit_cols[o] + g[:, o:o + 1]
        better = sc > best
        best = jnp.where(better, sc, best)
        best_idx = jnp.where(better, float(o), best_idx)

    logp, _ = _categorical_cols(logit_cols, best_idx.astype(jnp.int32))

    # lanes: 0 -> sampled action (as f32), 1 -> its log-prob; single dense store
    out_ref[...] = _pack_lanes([best_idx, logp], out_ref.shape)


# ----------------------------------------------------------------------------
# Wrappers
# ----------------------------------------------------------------------------
def hypernet_forward(meta_v, state, params, S, H, O):
    """HyperNetwork.forward: returns (out (B, O), hidden_layer_out (B, H))."""
    B, M = meta_v.shape
    Bp, TB, vmem_limit = _select_tiling(B, M, S, H, max(O, 1), _param_bytes(params))
    meta_p = _pad_rows(meta_v.astype(jnp.float32), Bp)
    state_p = _pad_rows(state.astype(jnp.float32), Bp)
    pack = _round_up(max(O, 1), _PACK)

    out_slab, h = pl.pallas_call(
        functools.partial(_hypernet_kernel, S, H, O),
        grid=(Bp // TB,),
        out_shape=(jax.ShapeDtypeStruct((Bp, pack), jnp.float32),
                   jax.ShapeDtypeStruct((Bp, H), jnp.float32)),
        in_specs=[_row_spec(TB, M), _row_spec(TB, S)] + _param_specs(params),
        out_specs=(pl.BlockSpec((TB, pack), lambda i: (i, 0)),
                   pl.BlockSpec((TB, H), lambda i: (i, 0))),
        compiler_params=_compiler_params(vmem_limit),
    )(meta_p, state_p, *params)
    return out_slab[:B, :O], h[:B]


def hyperac_evaluate(meta_v, state, action, actor_params, critic_params, S, H, A):
    B, M = meta_v.shape
    pbytes = _param_bytes(actor_params) + _param_bytes(critic_params)
    Bp, TB, vmem_limit = _select_tiling(B, M, S, H, max(A, 1), pbytes)
    meta_p = _pad_rows(meta_v.astype(jnp.float32), Bp)
    state_p = _pad_rows(state.astype(jnp.float32), Bp)
    act_p = _pad_rows(action.reshape(B, 1).astype(jnp.int32), Bp)

    slab = pl.pallas_call(
        functools.partial(_evaluate_kernel, S, H, A),
        grid=(Bp // TB,),
        out_shape=jax.ShapeDtypeStruct((Bp, _PACK), jnp.float32),
        in_specs=([_row_spec(TB, M), _row_spec(TB, S), _row_spec(TB, 1)]
                  + _param_specs(actor_params) + _param_specs(critic_params)),
        out_specs=pl.BlockSpec((TB, _PACK), lambda i: (i, 0)),
        compiler_params=_compiler_params(vmem_limit),
    )(meta_p, state_p, act_p, *actor_params, *critic_params)

    return slab[:B, 0], slab[:B, 1:2], slab[:B, 2]


def hyperac_act(meta_v, state, key, actor_params, S, H, A):
    B, M = meta_v.shape
    Bp, TB, vmem_limit = _select_tiling(B, M, S, H, max(A, 1),
                                        _param_bytes(actor_params))
    # TODO(synk): torch Categorical.sample() RNG cannot be matched bit-exactly;
    # Gumbel-max with jax.random noise (fed into the kernel) is the same distribution.
    g = jax.random.gumbel(key, (B, A), jnp.float32)
    meta_p = _pad_rows(meta_v.astype(jnp.float32), Bp)
    state_p = _pad_rows(state.astype(jnp.float32), Bp)
    g_p = _pad_rows(g, Bp)

    slab = pl.pallas_call(
        functools.partial(_act_kernel, S, H, A),
        grid=(Bp // TB,),
        out_shape=jax.ShapeDtypeStruct((Bp, _PACK), jnp.float32),
        in_specs=([_row_spec(TB, M), _row_spec(TB, S), _row_spec(TB, A)]
                  + _param_specs(actor_params)),
        out_specs=pl.BlockSpec((TB, _PACK), lambda i: (i, 0)),
        compiler_params=_compiler_params(vmem_limit),
    )(meta_p, state_p, g_p, *actor_params)

    action = slab[:B, 0].astype(jnp.int32)
    logp = slab[:B, 1]
    return action, logp


class HyperACPallas:
    """JAX/Pallas port of HyperAC (actor + critic hyper-networks, PPO)."""

    def __init__(self, meta_v_dim, state_dim, action_dim, hidden_dim=256,
                 key=None, use_bf16=True):
        self.M, self.S, self.A, self.H = meta_v_dim, state_dim, action_dim, hidden_dim
        # bf16 operands (f32 accumulation) for the two large MXU dots.
        self.mxu_dtype = jnp.bfloat16 if use_bf16 else jnp.float32
        key = jax.random.PRNGKey(0) if key is None else key
        ka, kc = jax.random.split(key)
        self.actor_raw = self._init_hypernet(ka, meta_v_dim, state_dim, action_dim, hidden_dim)
        self.critic_raw = self._init_hypernet(kc, meta_v_dim, state_dim, 1, hidden_dim)
        self.actor_params = self._pack(self.actor_raw, state_dim, hidden_dim)
        self.critic_params = self._pack(self.critic_raw, state_dim, hidden_dim)

    @staticmethod
    def _init_hypernet(key, M, S, O, H):
        ks = jax.random.split(key, 6)
        scale = 0.1

        def lin(k, fan_in, fan_out):
            kw, kb = jax.random.split(k)
            return (scale * jax.random.normal(kw, (fan_in, fan_out), jnp.float32),
                    scale * jax.random.normal(kb, (1, fan_out), jnp.float32))

        w1a, b1a = lin(ks[0], M, H)          # hyper_w1 layer 1
        w1b, b1b = lin(ks[1], H, S * H)      # hyper_w1 layer 2 -> flat W1 (S, H)
        wb1, bb1 = lin(ks[2], M, H)          # hyper_b1
        w2a, b2a = lin(ks[3], M, H)          # hyper_w2 layer 1
        w2b, b2b = lin(ks[4], H, O * H)      # hyper_w2 layer 2 -> flat W2 (O, H)
        wb2, bb2 = lin(ks[5], M, O)          # hyper_b2
        return [w1a, b1a, w1b, b1b, wb1, bb1, w2a, b2a, w2b, b2b, wb2, bb2]

    def _pack(self, raw, S, H):
        """Host-side weight packing:
        * fuse the four meta-driven heads into one (M, 3H+O) matmul, and
        * Khatri-Rao-permute hyper_w1's output weight so base-net layer 1
          becomes a single MXU matmul in the kernel.
        """
        w1a, b1a, w1b, b1b, wb1, bb1, w2a, b2a, w2b, b2b, wb2, bb2 = raw
        wha = jnp.concatenate([w1a, w2a, wb1, wb2], axis=1)          # (M, 3H+O)
        bha = jnp.concatenate([b1a, b2a, bb1, bb2], axis=1)          # (1, 3H+O)
        w1p = w1b.reshape(H, S, H).transpose(1, 0, 2).reshape(S * H, H)  # (S*H, H)
        b1p = b1b.reshape(S, H)                                          # (S, H)
        mxu = self.mxu_dtype
        return [wha, bha, w1p.astype(mxu), b1p, w2b.astype(mxu), b2b]

    def actor(self, meta_v, state):
        return hypernet_forward(meta_v, state, self.actor_params, self.S, self.H, self.A)

    def critic(self, meta_v, state):
        return hypernet_forward(meta_v, state, self.critic_params, self.S, self.H, 1)

    def act(self, meta_v, state, key):
        return hyperac_act(meta_v, state, key, self.actor_params, self.S, self.H, self.A)

    def evaluate(self, meta_v, state, action):
        return hyperac_evaluate(meta_v, state, action, self.actor_params,
                                self.critic_params, self.S, self.H, self.A)


# ----------------------------------------------------------------------------
# Pure-JAX reference (for correctness check)
# ----------------------------------------------------------------------------
def _hypernet_ref(meta, state, p, S, H, O):
    w1a, b1a, w1b, b1b, wb1, bb1, w2a, b2a, w2b, b2b, wb2, bb2 = p
    B = meta.shape[0]
    z1 = jax.nn.relu(meta @ w1a + b1a)
    W1 = (z1 @ w1b + b1b).reshape(B, S, H)
    b1 = meta @ wb1 + bb1
    z2 = jax.nn.relu(meta @ w2a + b2a)
    W2 = (z2 @ w2b + b2b).reshape(B, O, H)
    b2 = meta @ wb2 + bb2
    h = jax.nn.relu(jnp.einsum('bs,bsh->bh', state, W1) + b1)
    out = jnp.einsum('bh,boh->bo', h, W2) + b2
    return out, h


def _evaluate_ref(model, meta, state, action):
    logits, _ = _hypernet_ref(meta, state, model.actor_raw, model.S, model.H, model.A)
    logp_all = jax.nn.log_softmax(logits, axis=-1)
    logp = jnp.take_along_axis(logp_all, action[:, None].astype(jnp.int32), axis=-1)[:, 0]
    ent = -jnp.sum(jnp.exp(logp_all) * logp_all, axis=-1)
    values, _ = _hypernet_ref(meta, state, model.critic_raw, model.S, model.H, 1)
    return logp, values, ent


# ----------------------------------------------------------------------------
if __name__ == "__main__":
    B, META_V_DIM, STATE_DIM, ACTION_DIM, HIDDEN_DIM = 8, 8, 16, 4, 32
    TOL = dict(atol=2e-2, rtol=2e-2)   # bf16 MXU operands (f32 accumulation)

    key = jax.random.PRNGKey(0)
    k_model, k_meta, k_state, k_act, k_sample, k_big = jax.random.split(key, 6)

    model = HyperACPallas(META_V_DIM, STATE_DIM, ACTION_DIM, HIDDEN_DIM, key=k_model)

    meta_v = jax.random.normal(k_meta, (B, META_V_DIM), jnp.float32)
    state = jax.random.normal(k_state, (B, STATE_DIM), jnp.float32)
    action = jax.random.randint(k_act, (B,), 0, ACTION_DIM, jnp.int32)

    # evaluate(): action_logprobs (B,), state_values (B, 1), dist_entropy (B,)
    logp, values, ent = model.evaluate(meta_v, state, action)
    jax.block_until_ready((logp, values, ent))

    # act(): sampled action + its log-prob
    a, a_logp = model.act(meta_v, state, k_sample)
    jax.block_until_ready((a, a_logp))

    # standalone HyperNetwork forward (actor): (logits, actor_layer_out)
    logits, h = model.actor(meta_v, state)
    jax.block_until_ready((logits, h))

    # correctness check vs pure-JAX f32 reference
    r_logp, r_values, r_ent = _evaluate_ref(model, meta_v, state, action)
    assert jnp.allclose(logp, r_logp, **TOL)
    assert jnp.allclose(values, r_values, **TOL)
    assert jnp.allclose(ent, r_ent, **TOL)

    r_logits, r_h = _hypernet_ref(meta_v, state, model.actor_raw,
                                  STATE_DIM, HIDDEN_DIM, ACTION_DIM)
    assert jnp.allclose(logits, r_logits, **TOL)
    assert jnp.allclose(h, r_h, **TOL)

    # act(): log-prob must match log-softmax of the actor logits at the sampled action
    lp_all = jax.nn.log_softmax(r_logits, axis=-1)
    r_alogp = jnp.take_along_axis(lp_all, a[:, None], axis=-1)[:, 0]
    assert jnp.allclose(a_logp, r_alogp, **TOL)
    assert bool(jnp.all((a >= 0) & (a < ACTION_DIM)))

    # larger (non-divisible) batch exercises row padding + the >=2-step parallel grid
    B2 = 24
    km2, ks2, ka2 = jax.random.split(k_big, 3)
    meta2 = jax.random.normal(km2, (B2, META_V_DIM), jnp.float32)
    state2 = jax.random.normal(ks2, (B2, STATE_DIM), jnp.float32)
    action2 = jax.random.randint(ka2, (B2,), 0, ACTION_DIM, jnp.int32)
    logp2, values2, ent2 = model.evaluate(meta2, state2, action2)
    jax.block_until_ready((logp2, values2, ent2))
    r_logp2, r_values2, r_ent2 = _evaluate_ref(model, meta2, state2, action2)
    assert jnp.allclose(logp2, r_logp2, **TOL)
    assert jnp.allclose(values2, r_values2, **TOL)
    assert jnp.allclose(ent2, r_ent2, **TOL)

    print("KERNEL_OK")
</pallas_src>

<mosaic_0001>
module attributes {stable_mosaic.version = 11 : i64} {
  func.func @_evaluate_kernel(%arg0: i32, %arg1: memref<8x8xf32, #tpu.memory_space<vmem>>, %arg2: memref<8x16xf32, #tpu.memory_space<vmem>>, %arg3: memref<8x1xi32, #tpu.memory_space<vmem>>, %arg4: memref<8x100xf32, #tpu.memory_space<vmem>>, %arg5: memref<1x100xf32, #tpu.memory_space<vmem>>, %arg6: memref<512x32xbf16, #tpu.memory_space<vmem>>, %arg7: memref<16x32xf32, #tpu.memory_space<vmem>>, %arg8: memref<32x128xbf16, #tpu.memory_space<vmem>>, %arg9: memref<1x128xf32, #tpu.memory_space<vmem>>, %arg10: memref<8x97xf32, #tpu.memory_space<vmem>>, %arg11: memref<1x97xf32, #tpu.memory_space<vmem>>, %arg12: memref<512x32xbf16, #tpu.memory_space<vmem>>, %arg13: memref<16x32xf32, #tpu.memory_space<vmem>>, %arg14: memref<32x32xbf16, #tpu.memory_space<vmem>>, %arg15: memref<1x32xf32, #tpu.memory_space<vmem>>, %arg16: memref<8x128xf32, #tpu.memory_space<vmem>>) attributes {dimension_semantics = [#tpu.dimension_semantics<parallel>], iteration_bounds = array<i64: 1>, scalar_prefetch = 0 : i64, scratch_operands = 0 : i64, tpu.core_type = #tpu.core_type<tc>, window_params = [{transform_indices = @transform_0, window_bounds = array<i64: 8, 8>}, {transform_indices = @transform_1, window_bounds = array<i64: 8, 16>}, {transform_indices = @transform_2, window_bounds = array<i64: 8, 1>}, {pipeline_mode = #tpu.pipeline_mode<synchronous>, transform_indices = @transform_3, window_bounds = array<i64: 8, 100>}, {pipeline_mode = #tpu.pipeline_mode<synchronous>, transform_indices = @transform_4, window_bounds = array<i64: 1, 100>}, {pipeline_mode = #tpu.pipeline_mode<synchronous>, transform_indices = @transform_5, window_bounds = array<i64: 512, 32>}, {pipeline_mode = #tpu.pipeline_mode<synchronous>, transform_indices = @transform_6, window_bounds = array<i64: 16, 32>}, {pipeline_mode = #tpu.pipeline_mode<synchronous>, transform_indices = @transform_7, window_bounds = array<i64: 32, 128>}, {pipeline_mode = #tpu.pipeline_mode<synchronous>, transform_indices = @transform_8, window_bounds = array<i64: 1, 128>}, {pipeline_mode = #tpu.pipeline_mode<synchronous>, transform_indices = @transform_9, window_bounds = array<i64: 8, 97>}, {pipeline_mode = #tpu.pipeline_mode<synchronous>, transform_indices = @transform_10, window_bounds = array<i64: 1, 97>}, {pipeline_mode = #tpu.pipeline_mode<synchronous>, transform_indices = @transform_11, window_bounds = array<i64: 512, 32>}, {pipeline_mode = #tpu.pipeline_mode<synchronous>, transform_indices = @transform_12, window_bounds = array<i64: 16, 32>}, {pipeline_mode = #tpu.pipeline_mode<synchronous>, transform_indices = @transform_13, window_bounds = array<i64: 32, 32>}, {pipeline_mode = #tpu.pipeline_mode<synchronous>, transform_indices = @transform_14, window_bounds = array<i64: 1, 32>}, {transform_indices = @transform_15, window_bounds = array<i64: 8, 128>}]} {
    %c0 = arith.constant 0 : index
    %c0_0 = arith.constant 0 : index
    %0 = vector.load %arg1[%c0, %c0_0] : memref<8x8xf32, #tpu.memory_space<vmem>>, vector<8x8xf32>
    %c0_1 = arith.constant 0 : index
    %c0_2 = arith.constant 0 : index
    %1 = vector.load %arg2[%c0_1, %c0_2] : memref<8x16xf32, #tpu.memory_space<vmem>>, vector<8x16xf32>
    %c0_3 = arith.constant 0 : index
    %c0_4 = arith.constant 0 : index
    %2 = vector.load %arg3[%c0_3, %c0_4] : memref<8x1xi32, #tpu.memory_space<vmem>>, vector<8x1xi32>
    %c0_5 = arith.constant 0 : index
    %c0_6 = arith.constant 0 : index
    %3 = vector.load %arg4[%c0_5, %c0_6] : memref<8x100xf32, #tpu.memory_space<vmem>>, vector<8x100xf32>
    %c0_7 = arith.constant 0 : index
    %c0_8 = arith.constant 0 : index
    %4 = vector.load %arg5[%c0_7, %c0_8] : memref<1x100xf32, #tpu.memory_space<vmem>>, vector<1x100xf32>
    %c0_9 = arith.constant 0 : index
    %c0_10 = arith.constant 0 : index
    %5 = vector.load %arg6[%c0_9, %c0_10] : memref<512x32xbf16, #tpu.memory_space<vmem>>, vector<512x32xbf16>
    %c0_11 = arith.constant 0 : index
    %c0_12 = arith.constant 0 : index
    %6 = vector.load %arg7[%c0_11, %c0_12] : memref<16x32xf32, #tpu.memory_space<vmem>>, vector<16x32xf32>
    %c0_13 = arith.constant 0 : index
    %c0_14 = arith.constant 0 : index
    %7 = vector.load %arg8[%c0_13, %c0_14] : memref<32x128xbf16, #tpu.memory_space<vmem>>, vector<32x128xbf16>
    %c0_15 = arith.constant 0 : index
    %c0_16 = arith.constant 0 : index
    %8 = vector.load %arg9[%c0_15, %c0_16] : memref<1x128xf32, #tpu.memory_space<vmem>>, vector<1x128xf32>
    %cst = arith.constant dense<0.000000e+00> : vector<8x100xf32>
    %9 = tpu.matmul %0, %3, %cst {dimension_numbers = #tpu.dot_dimension_numbers<[1], [0], [0], [1], [0, 0, 1, 1], [], []>} : vector<8x8xf32>, vector<8x100xf32>, vector<8x100xf32> -> vector<8x100xf32>
    %10 = vector.broadcast %4 : vector<1x100xf32> to vector<8x100xf32>
    %11 = arith.addf %9, %10 : vector<8x100xf32>
    %12 = vector.extract_strided_slice %11 {offsets = [0, 0], sizes = [8, 32], strides = [1, 1]} : vector<8x100xf32> to vector<8x32xf32>
    %cst_17 = arith.constant 0.000000e+00 : f32
    %13 = vector.broadcast %cst_17 : f32 to vector<8x32xf32>
    %14 = arith.maximumf %12, %13 : vector<8x32xf32>
    %15 = vector.extract_strided_slice %11 {offsets = [0, 32], sizes = [8, 32], strides = [1, 1]} : vector<8x100xf32> to vector<8x32xf32>
    %cst_18 = arith.constant 0.000000e+00 : f32
    %16 = vector.broadcast %cst_18 : f32 to vector<8x32xf32>
    %17 = arith.maximumf %15, %16 : vector<8x32xf32>
    %18 = vector.extract_strided_slice %11 {offsets = [0, 64], sizes = [8, 32], strides = [1, 1]} : vector<8x100xf32> to vector<8x32xf32>
    %19 = vector.extract_strided_slice %11 {offsets = [0, 96], sizes = [8, 4], strides = [1, 1]} : vector<8x100xf32> to vector<8x4xf32>
    %20 = vector.extract_strided_slice %1 {offsets = [0, 0], sizes = [8, 1], strides = [1, 1]} : vector<8x16xf32> to vector<8x1xf32>
    %21 = vector.broadcast %20 : vector<8x1xf32> to vector<8x32xf32>
    %22 = arith.mulf %21, %14 : vector<8x32xf32>
    %23 = vector.extract_strided_slice %1 {offsets = [0, 1], sizes = [8, 1], strides = [1, 1]} : vector<8x16xf32> to vector<8x1xf32>
    %24 = vector.broadcast %23 : vector<8x1xf32> to vector<8x32xf32>
    %25 = arith.mulf %24, %14 : vector<8x32xf32>
    %26 = vector.extract_strided_slice %1 {offsets = [0, 2], sizes = [8, 1], strides = [1, 1]} : vector<8x16xf32> to vector<8x1xf32>
    %27 = vector.broadcast %26 : vector<8x1xf32> to vector<8x32xf32>
    %28 = arith.mulf %27, %14 : vector<8x32xf32>
    %29 = vector.extract_strided_slice %1 {offsets = [0, 3], sizes = [8, 1], strides = [1, 1]} : vector<8x16xf32> to vector<8x1xf32>
    %30 = vector.broadcast %29 : vector<8x1xf32> to vector<8x32xf32>
    %31 = arith.mulf %30, %14 : vector<8x32xf32>
    %32 = vector.extract_strided_slice %1 {offsets = [0, 4], sizes = [8, 1], strides = [1, 1]} : vector<8x16xf32> to vector<8x1xf32>
    %33 = vector.broadcast %32 : vector<8x1xf32> to vector<8x32xf32>
    %34 = arith.mulf %33, %14 : vector<8x32xf32>
    %35 = vector.extract_strided_slice %1 {offsets = [0, 5], sizes = [8, 1], strides = [1, 1]} : vector<8x16xf32> to vector<8x1xf32>
    %36 = vector.broadcast %35 : vector<8x1xf32> to vector<8x32xf32>
    %37 = arith.mulf %36, %14 : vector<8x32xf32>
    %38 = vector.extract_strided_slice %1 {offsets = [0, 6], sizes = [8, 1], strides = [1, 1]} : vector<8x16xf32> to vector<8x1xf32>
    %39 = vector.broadcast %38 : vector<8x1xf32> to vector<8x32xf32>
    %40 = arith.mulf %39, %14 : vector<8x32xf32>
    %41 = vector.extract_strided_slice %1 {offsets = [0, 7], sizes = [8, 1], strides = [1, 1]} : vector<8x16xf32> to vector<8x1xf32>
    %42 = vector.broadcast %41 : vector<8x1xf32> to vector<8x32xf32>
    %43 = arith.mulf %42, %14 : vector<8x32xf32>
    %44 = vector.extract_strided_slice %1 {offsets = [0, 8], sizes = [8, 1], strides = [1, 1]} : vector<8x16xf32> to vector<8x1xf32>
    %45 = vector.broadcast %44 : vector<8x1xf32> to vector<8x32xf32>
    %46 = arith.mulf %45, %14 : vector<8x32xf32>
    %47 = vector.extract_strided_slice %1 {offsets = [0, 9], sizes = [8, 1], strides = [1, 1]} : vector<8x16xf32> to vector<8x1xf32>
    %48 = vector.broadcast %47 : vector<8x1xf32> to vector<8x32xf32>
    %49 = arith.mulf %48, %14 : vector<8x32xf32>
    %50 = vector.extract_strided_slice %1 {offsets = [0, 10], sizes = [8, 1], strides = [1, 1]} : vector<8x16xf32> to vector<8x1xf32>
    %51 = vector.broadcast %50 : vector<8x1xf32> to vector<8x32xf32>
    %52 = arith.mulf %51, %14 : vector<8x32xf32>
    %53 = vector.extract_strided_slice %1 {offsets = [0, 11], sizes = [8, 1], strides = [1, 1]} : vector<8x16xf32> to vector<8x1xf32>
    %54 = vector.broadcast %53 : vector<8x1xf32> to vector<8x32xf32>
    %55 = arith.mulf %54, %14 : vector<8x32xf32>
    %56 = vector.extract_strided_slice %1 {offsets = [0, 12], sizes = [8, 1], strides = [1, 1]} : vector<8x16xf32> to vector<8x1xf32>
    %57 = vector.broadcast %56 : vector<8x1xf32> to vector<8x32xf32>
    %58 = arith.mulf %57, %14 : vector<8x32xf32>
    %59 = vector.extract_strided_slice %1 {offsets = [0, 13], sizes = [8, 1], strides = [1, 1]} : vector<8x16xf32> to vector<8x1xf32>
    %60 = vector.broadcast %59 : vector<8x1xf32> to vector<8x32xf32>
    %61 = arith.mulf %60, %14 : vector<8x32xf32>
    %62 = vector.extract_strided_slice %1 {offsets = [0, 14], sizes = [8, 1], strides = [1, 1]} : vector<8x16xf32> to vector<8x1xf32>
    %63 = vector.broadcast %62 : vector<8x1xf32> to vector<8x32xf32>
    %64 = arith.mulf %63, %14 : vector<8x32xf32>
    %65 = vector.extract_strided_slice %1 {offsets = [0, 15], sizes = [8, 1], strides = [1, 1]} : vector<8x16xf32> to vector<8x1xf32>
    %66 = vector.broadcast %65 : vector<8x1xf32> to vector<8x32xf32>
    %67 = arith.mulf %66, %14 : vector<8x32xf32>
    %68 = tpu.concatenate %22, %25, %28, %31, %34, %37, %40, %43, %46, %49, %52, %55, %58, %61, %64, %67 in 1 : vector<8x32xf32>, vector<8x32xf32>, vector<8x32xf32>, vector<8x32xf32>, vector<8x32xf32>, vector<8x32xf32>, vector<8x32xf32>, vector<8x32xf32>, vector<8x32xf32>, vector<8x32xf32>, vector<8x32xf32>, vector<8x32xf32>, vector<8x32xf32>, vector<8x32xf32>, vector<8x32xf32>, vector<8x32xf32> -> vector<8x512xf32>
    %69 = arith.truncf %68 : vector<8x512xf32> to vector<8x512xbf16>
    %cst_19 = arith.constant dense<0.000000e+00> : vector<8x32xf32>
    %70 = tpu.matmul %69, %5, %cst_19 {dimension_numbers = #tpu.dot_dimension_numbers<[1], [0], [0], [1], [0, 0, 1, 1], [], []>} : vector<8x512xbf16>, vector<512x32xbf16>, vector<8x32xf32> -> vector<8x32xf32>
    %cst_20 = arith.constant dense<0.000000e+00> : vector<8x32xf32>
    %71 = tpu.matmul %1, %6, %cst_20 {dimension_numbers = #tpu.dot_dimension_numbers<[1], [0], [0], [1], [0, 0, 1, 1], [], []>} : vector<8x16xf32>, vector<16x32xf32>, vector<8x32xf32> -> vector<8x32xf32>
    %72 = arith.addf %70, %71 : vector<8x32xf32>
    %73 = arith.addf %72, %18 : vector<8x32xf32>
    %cst_21 = arith.constant 0.000000e+00 : f32
    %74 = vector.broadcast %cst_21 : f32 to vector<8x32xf32>
    %75 = arith.maximumf %73, %74 : vector<8x32xf32>
    %76 = arith.truncf %17 : vector<8x32xf32> to vector<8x32xbf16>
    %cst_22 = arith.constant dense<0.000000e+00> : vector<8x128xf32>
    %77 = tpu.matmul %76, %7, %cst_22 {dimension_numbers = #tpu.dot_dimension_numbers<[1], [0], [0], [1], [0, 0, 1, 1], [], []>} : vector<8x32xbf16>, vector<32x128xbf16>, vector<8x128xf32> -> vector<8x128xf32>
    %78 = vector.broadcast %8 : vector<1x128xf32> to vector<8x128xf32>
    %79 = arith.addf %77, %78 : vector<8x128xf32>
    %80 = vector.extract_strided_slice %79 {offsets = [0, 0], sizes = [8, 32], strides = [1, 1]} : vector<8x128xf32> to vector<8x32xf32>
    %81 = arith.mulf %75, %80 : vector<8x32xf32>
    %cst_23 = arith.constant dense<0.000000e+00> : vector<8xf32>
    %82 = vector.multi_reduction <add>, %81, %cst_23 [1] : vector<8x32xf32> to vector<8xf32>
    %83 = vector.shape_cast %82 : vector<8xf32> to vector<8x1xf32>
    %84 = vector.extract_strided_slice %19 {offsets = [0, 0], sizes = [8, 1], strides = [1, 1]} : vector<8x4xf32> to vector<8x1xf32>
    %85 = arith.addf %83, %84 : vector<8x1xf32>
    %86 = vector.extract_strided_slice %79 {offsets = [0, 32], sizes = [8, 32], strides = [1, 1]} : vector<8x128xf32> to vector<8x32xf32>
    %87 = arith.mulf %75, %86 : vector<8x32xf32>
    %cst_24 = arith.constant dense<0.000000e+00> : vector<8xf32>
    %88 = vector.multi_reduction <add>, %87, %cst_24 [1] : vector<8x32xf32> to vector<8xf32>
    %89 = vector.shape_cast %88 : vector<8xf32> to vector<8x1xf32>
    %90 = vector.extract_strided_slice %19 {offsets = [0, 1], sizes = [8, 1], strides = [1, 1]} : vector<8x4xf32> to vector<8x1xf32>
    %91 = arith.addf %89, %90 : vector<8x1xf32>
    %92 = vector.extract_strided_slice %79 {offsets = [0, 64], sizes = [8, 32], strides = [1, 1]} : vector<8x128xf32> to vector<8x32xf32>
    %93 = arith.mulf %75, %92 : vector<8x32xf32>
    %cst_25 = arith.constant dense<0.000000e+00> : vector<8xf32>
    %94 = vector.multi_reduction <add>, %93, %cst_25 [1] : vector<8x32xf32> to vector<8xf32>
    %95 = vector.shape_cast %94 : vector<8xf32> to vector<8x1xf32>
    %96 = vector.extract_strided_slice %19 {offsets = [0, 2], sizes = [8, 1], strides = [1, 1]} : vector<8x4xf32> to vector<8x1xf32>
    %97 = arith.addf %95, %96 : vector<8x1xf32>
    %98 = vector.extract_strided_slice %79 {offsets = [0, 96], sizes = [8, 32], strides = [1, 1]} : vector<8x128xf32> to vector<8x32xf32>
    %99 = arith.mulf %75, %98 : vector<8x32xf32>
    %cst_26 = arith.constant dense<0.000000e+00> : vector<8xf32>
    %100 = vector.multi_reduction <add>, %99, %cst_26 [1] : vector<8x32xf32> to vector<8xf32>
    %101 = vector.shape_cast %100 : vector<8xf32> to vector<8x1xf32>
    %102 = vector.extract_strided_slice %19 {offsets = [0, 3], sizes = [8, 1], strides = [1, 1]} : vector<8x4xf32> to vector<8x1xf32>
    %103 = arith.addf %101, %102 : vector<8x1xf32>
    %104 = arith.maximumf %85, %91 : vector<8x1xf32>
    %105 = arith.maximumf %104, %97 : vector<8x1xf32>
    %106 = arith.maximumf %105, %103 : vector<8x1xf32>
    %107 = arith.subf %85, %106 : vector<8x1xf32>
    %108 = math.exp %107 : vector<8x1xf32>
    %109 = arith.subf %91, %106 : vector<8x1xf32>
    %110 = math.exp %109 : vector<8x1xf32>
    %111 = arith.addf %108, %110 : vector<8x1xf32>
    %112 = arith.subf %97, %106 : vector<8x1xf32>
    %113 = math.exp %112 : vector<8x1xf32>
    %114 = arith.addf %111, %113 : vector<8x1xf32>
    %115 = arith.subf %103, %106 : vector<8x1xf32>
    %116 = math.exp %115 : vector<8x1xf32>
    %117 = arith.addf %114, %116 : vector<8x1xf32>
    %118 = math.log %117 : vector<8x1xf32>
    %119 = arith.addf %106, %118 : vector<8x1xf32>
    %cst_27 = arith.constant 0.000000e+00 : f32
    %120 = vector.broadcast %cst_27 : f32 to vector<8x1xf32>
    %cst_28 = arith.constant 0.000000e+00 : f32
    %121 = vector.broadcast %cst_28 : f32 to vector<8x1xf32>
    %122 = arith.subf %85, %119 : vector<8x1xf32>
    %c0_i32 = arith.constant 0 : i32
    %123 = vector.broadcast %c0_i32 : i32 to vector<8x1xi32>
    %124 = arith.cmpi eq, %2, %123 : vector<8x1xi32>
    %cst_29 = arith.constant 0.000000e+00 : f32
    %125 = vector.broadcast %cst_29 : f32 to vector<8x1xf32>
    %126 = arith.select %124, %122, %125 : vector<8x1xi1>, vector<8x1xf32>
    %127 = arith.addf %120, %126 : vector<8x1xf32>
    %128 = math.exp %122 : vector<8x1xf32>
    %129 = arith.mulf %128, %122 : vector<8x1xf32>
    %130 = arith.subf %121, %129 : vector<8x1xf32>
    %131 = arith.subf %91, %119 : vector<8x1xf32>
    %c1_i32 = arith.constant 1 : i32
    %132 = vector.broadcast %c1_i32 : i32 to vector<8x1xi32>
    %133 = arith.cmpi eq, %2, %132 : vector<8x1xi32>
    %cst_30 = arith.constant 0.000000e+00 : f32
    %134 = vector.broadcast %cst_30 : f32 to vector<8x1xf32>
    %135 = arith.select %133, %131, %134 : vector<8x1xi1>, vector<8x1xf32>
    %136 = arith.addf %127, %135 : vector<8x1xf32>
    %137 = math.exp %131 : vector<8x1xf32>
    %138 = arith.mulf %137, %131 : vector<8x1xf32>
    %139 = arith.subf %130, %138 : vector<8x1xf32>
    %140 = arith.subf %97, %119 : vector<8x1xf32>
    %c2_i32 = arith.constant 2 : i32
    %141 = vector.broadcast %c2_i32 : i32 to vector<8x1xi32>
    %142 = arith.cmpi eq, %2, %141 : vector<8x1xi32>
    %cst_31 = arith.constant 0.000000e+00 : f32
    %143 = vector.broadcast %cst_31 : f32 to vector<8x1xf32>
    %144 = arith.select %142, %140, %143 : vector<8x1xi1>, vector<8x1xf32>
    %145 = arith.addf %136, %144 : vector<8x1xf32>
    %146 = math.exp %140 : vector<8x1xf32>
    %147 = arith.mulf %146, %140 : vector<8x1xf32>
    %148 = arith.subf %139, %147 : vector<8x1xf32>
    %149 = arith.subf %103, %119 : vector<8x1xf32>
    %c3_i32 = arith.constant 3 : i32
    %150 = vector.broadcast %c3_i32 : i32 to vector<8x1xi32>
    %151 = arith.cmpi eq, %2, %150 : vector<8x1xi32>
    %cst_32 = arith.constant 0.000000e+00 : f32
    %152 = vector.broadcast %cst_32 : f32 to vector<8x1xf32>
    %153 = arith.select %151, %149, %152 : vector<8x1xi1>, vector<8x1xf32>
    %154 = arith.addf %145, %153 : vector<8x1xf32>
    %155 = math.exp %149 : vector<8x1xf32>
    %156 = arith.mulf %155, %149 : vector<8x1xf32>
    %157 = arith.subf %148, %156 : vector<8x1xf32>
    %c0_33 = arith.constant 0 : index
    %c0_34 = arith.constant 0 : index
    %158 = vector.load %arg10[%c0_33, %c0_34] : memref<8x97xf32, #tpu.memory_space<vmem>>, vector<8x97xf32>
    %c0_35 = arith.constant 0 : index
    %c0_36 = arith.constant 0 : index
    %159 = vector.load %arg11[%c0_35, %c0_36] : memref<1x97xf32, #tpu.memory_space<vmem>>, vector<1x97xf32>
    %c0_37 = arith.constant 0 : index
    %c0_38 = arith.constant 0 : index
    %160 = vector.load %arg12[%c0_37, %c0_38] : memref<512x32xbf16, #tpu.memory_space<vmem>>, vector<512x32xbf16>
    %c0_39 = arith.constant 0 : index
    %c0_40 = arith.constant 0 : index
    %161 = vector.load %arg13[%c0_39, %c0_40] : memref<16x32xf32, #tpu.memory_space<vmem>>, vector<16x32xf32>
    %c0_41 = arith.constant 0 : index
    %c0_42 = arith.constant 0 : index
    %162 = vector.load %arg14[%c0_41, %c0_42] : memref<32x32xbf16, #tpu.memory_space<vmem>>, vector<32x32xbf16>
    %c0_43 = arith.constant 0 : index
    %c0_44 = arith.constant 0 : index
    %163 = vector.load %arg15[%c0_43, %c0_44] : memref<1x32xf32, #tpu.memory_space<vmem>>, vector<1x32xf32>
    %cst_45 = arith.constant dense<0.000000e+00> : vector<8x97xf32>
    %164 = tpu.matmul %0, %158, %cst_45 {dimension_numbers = #tpu.dot_dimension_numbers<[1], [0], [0], [1], [0, 0, 1, 1], [], []>} : vector<8x8xf32>, vector<8x97xf32>, vector<8x97xf32> -> vector<8x97xf32>
    %165 = vector.broadcast %159 : vector<1x97xf32> to vector<8x97xf32>
    %166 = arith.addf %164, %165 : vector<8x97xf32>
    %167 = vector.extract_strided_slice %166 {offsets = [0, 0], sizes = [8, 32], strides = [1, 1]} : vector<8x97xf32> to vector<8x32xf32>
    %cst_46 = arith.constant 0.000000e+00 : f32
    %168 = vector.broadcast %cst_46 : f32 to vector<8x32xf32>
    %169 = arith.maximumf %167, %168 : vector<8x32xf32>
    %170 = vector.extract_strided_slice %166 {offsets = [0, 32], sizes = [8, 32], strides = [1, 1]} : vector<8x97xf32> to vector<8x32xf32>
    %cst_47 = arith.constant 0.000000e+00 : f32
    %171 = vector.broadcast %cst_47 : f32 to vector<8x32xf32>
    %172 = arith.maximumf %170, %171 : vector<8x32xf32>
    %173 = vector.extract_strided_slice %166 {offsets = [0, 64], sizes = [8, 32], strides = [1, 1]} : vector<8x97xf32> to vector<8x32xf32>
    %174 = vector.extract_strided_slice %166 {offsets = [0, 96], sizes = [8, 1], strides = [1, 1]} : vector<8x97xf32> to vector<8x1xf32>
    %175 = vector.extract_strided_slice %1 {offsets = [0, 0], sizes = [8, 1], strides = [1, 1]} : vector<8x16xf32> to vector<8x1xf32>
    %176 = vector.broadcast %175 : vector<8x1xf32> to vector<8x32xf32>
    %177 = arith.mulf %176, %169 : vector<8x32xf32>
    %178 = vector.extract_strided_slice %1 {offsets = [0, 1], sizes = [8, 1], strides = [1, 1]} : vector<8x16xf32> to vector<8x1xf32>
    %179 = vector.broadcast %178 : vector<8x1xf32> to vector<8x32xf32>
    %180 = arith.mulf %179, %169 : vector<8x32xf32>
    %181 = vector.extract_strided_slice %1 {offsets = [0, 2], sizes = [8, 1], strides = [1, 1]} : vector<8x16xf32> to vector<8x1xf32>
    %182 = vector.broadcast %181 : vector<8x1xf32> to vector<8x32xf32>
    %183 = arith.mulf %182, %169 : vector<8x32xf32>
    %184 = vector.extract_strided_slice %1 {offsets = [0, 3], sizes = [8, 1], strides = [1, 1]} : vector<8x16xf32> to vector<8x1xf32>
    %185 = vector.broadcast %184 : vector<8x1xf32> to vector<8x32xf32>
    %186 = arith.mulf %185, %169 : vector<8x32xf32>
    %187 = vector.extract_strided_slice %1 {offsets = [0, 4], sizes = [8, 1], strides = [1, 1]} : vector<8x16xf32> to vector<8x1xf32>
    %188 = vector.broadcast %187 : vector<8x1xf32> to vector<8x32xf32>
    %189 = arith.mulf %188, %169 : vector<8x32xf32>
    %190 = vector.extract_strided_slice %1 {offsets = [0, 5], sizes = [8, 1], strides = [1, 1]} : vector<8x16xf32> to vector<8x1xf32>
    %191 = vector.broadcast %190 : vector<8x1xf32> to vector<8x32xf32>
    %192 = arith.mulf %191, %169 : vector<8x32xf32>
    %193 = vector.extract_strided_slice %1 {offsets = [0, 6], sizes = [8, 1], strides = [1, 1]} : vector<8x16xf32> to vector<8x1xf32>
    %194 = vector.broadcast %193 : vector<8x1xf32> to vector<8x32xf32>
    %195 = arith.mulf %194, %169 : vector<8x32xf32>
    %196 = vector.extract_strided_slice %1 {offsets = [0, 7], sizes = [8, 1], strides = [1, 1]} : vector<8x16xf32> to vector<8x1xf32>
    %197 = vector.broadcast %196 : vector<8x1xf32> to vector<8x32xf32>
    %198 = arith.mulf %197, %169 : vector<8x32xf32>
    %199 = vector.extract_strided_slice %1 {offsets = [0, 8], sizes = [8, 1], strides = [1, 1]} : vector<8x16xf32> to vector<8x1xf32>
    %200 = vector.broadcast %199 : vector<8x1xf32> to vector<8x32xf32>
    %201 = arith.mulf %200, %169 : vector<8x32xf32>
    %202 = vector.extract_strided_slice %1 {offsets = [0, 9], sizes = [8, 1], strides = [1, 1]} : vector<8x16xf32> to vector<8x1xf32>
    %203 = vector.broadcast %202 : vector<8x1xf32> to vector<8x32xf32>
    %204 = arith.mulf %203, %169 : vector<8x32xf32>
    %205 = vector.extract_strided_slice %1 {offsets = [0, 10], sizes = [8, 1], strides = [1, 1]} : vector<8x16xf32> to vector<8x1xf32>
    %206 = vector.broadcast %205 : vector<8x1xf32> to vector<8x32xf32>
    %207 = arith.mulf %206, %169 : vector<8x32xf32>
    %208 = vector.extract_strided_slice %1 {offsets = [0, 11], sizes = [8, 1], strides = [1, 1]} : vector<8x16xf32> to vector<8x1xf32>
    %209 = vector.broadcast %208 : vector<8x1xf32> to vector<8x32xf32>
    %210 = arith.mulf %209, %169 : vector<8x32xf32>
    %211 = vector.extract_strided_slice %1 {offsets = [0, 12], sizes = [8, 1], strides = [1, 1]} : vector<8x16xf32> to vector<8x1xf32>
    %212 = vector.broadcast %211 : vector<8x1xf32> to vector<8x32xf32>
    %213 = arith.mulf %212, %169 : vector<8x32xf32>
    %214 = vector.extract_strided_slice %1 {offsets = [0, 13], sizes = [8, 1], strides = [1, 1]} : vector<8x16xf32> to vector<8x1xf32>
    %215 = vector.broadcast %214 : vector<8x1xf32> to vector<8x32xf32>
    %216 = arith.mulf %215, %169 : vector<8x32xf32>
    %217 = vector.extract_strided_slice %1 {offsets = [0, 14], sizes = [8, 1], strides = [1, 1]} : vector<8x16xf32> to vector<8x1xf32>
    %218 = vector.broadcast %217 : vector<8x1xf32> to vector<8x32xf32>
    %219 = arith.mulf %218, %169 : vector<8x32xf32>
    %220 = vector.extract_strided_slice %1 {offsets = [0, 15], sizes = [8, 1], strides = [1, 1]} : vector<8x16xf32> to vector<8x1xf32>
    %221 = vector.broadcast %220 : vector<8x1xf32> to vector<8x32xf32>
    %222 = arith.mulf %221, %169 : vector<8x32xf32>
    %223 = tpu.concatenate %177, %180, %183, %186, %189, %192, %195, %198, %201, %204, %207, %210, %213, %216, %219, %222 in 1 : vector<8x32xf32>, vector<8x32xf32>, vector<8x32xf32>, vector<8x32xf32>, vector<8x32xf32>, vector<8x32xf32>, vector<8x32xf32>, vector<8x32xf32>, vector<8x32xf32>, vector<8x32xf32>, vector<8x32xf32>, vector<8x32xf32>, vector<8x32xf32>, vector<8x32xf32>, vector<8x32xf32>, vector<8x32xf32> -> vector<8x512xf32>
    %224 = arith.truncf %223 : vector<8x512xf32> to vector<8x512xbf16>
    %cst_48 = arith.constant dense<0.000000e+00> : vector<8x32xf32>
    %225 = tpu.matmul %224, %160, %cst_48 {dimension_numbers = #tpu.dot_dimension_numbers<[1], [0], [0], [1], [0, 0, 1, 1], [], []>} : vector<8x512xbf16>, vector<512x32xbf16>, vector<8x32xf32> -> vector<8x32xf32>
    %cst_49 = arith.constant dense<0.000000e+00> : vector<8x32xf32>
    %226 = tpu.matmul %1, %161, %cst_49 {dimension_numbers = #tpu.dot_dimension_numbers<[1], [0], [0], [1], [0, 0, 1, 1], [], []>} : vector<8x16xf32>, vector<16x32xf32>, vector<8x32xf32> -> vector<8x32xf32>
    %227 = arith.addf %225, %226 : vector<8x32xf32>
    %228 = arith.addf %227, %173 : vector<8x32xf32>
    %cst_50 = arith.constant 0.000000e+00 : f32
    %229 = vector.broadcast %cst_50 : f32 to vector<8x32xf32>
    %230 = arith.maximumf %228, %229 : vector<8x32xf32>
    %231 = arith.truncf %172 : vector<8x32xf32> to vector<8x32xbf16>
    %cst_51 = arith.constant dense<0.000000e+00> : vector<8x32xf32>
    %232 = tpu.matmul %231, %162, %cst_51 {dimension_numbers = #tpu.dot_dimension_numbers<[1], [0], [0], [1], [0, 0, 1, 1], [], []>} : vector<8x32xbf16>, vector<32x32xbf16>, vector<8x32xf32> -> vector<8x32xf32>
    %233 = vector.broadcast %163 : vector<1x32xf32> to vector<8x32xf32>
    %234 = arith.addf %232, %233 : vector<8x32xf32>
    %235 = arith.mulf %230, %234 : vector<8x32xf32>
    %cst_52 = arith.constant dense<0.000000e+00> : vector<8xf32>
    %236 = vector.multi_reduction <add>, %235, %cst_52 [1] : vector<8x32xf32> to vector<8xf32>
    %237 = vector.shape_cast %236 : vector<8xf32> to vector<8x1xf32>
    %238 = arith.addf %237, %174 : vector<8x1xf32>
    %239 = tpu.iota {dimensions = array<i32: 1>} : vector<8x128xi32>
    %cst_53 = arith.constant 0.000000e+00 : f32
    %240 = vector.broadcast %cst_53 : f32 to vector<8x128xf32>
    %c0_i32_54 = arith.constant 0 : i32
    %241 = vector.broadcast %c0_i32_54 : i32 to vector<8x128xi32>
    %242 = arith.cmpi eq, %239, %241 : vector<8x128xi32>
    %243 = vector.shape_cast %154 : vector<8x1xf32> to vector<8x1xf32>
    %244 = vector.broadcast %243 : vector<8x1xf32> to vector<8x128xf32>
    %245 = arith.select %242, %244, %240 : vector<8x128xi1>, vector<8x128xf32>
    %c1_i32_55 = arith.constant 1 : i32
    %246 = vector.broadcast %c1_i32_55 : i32 to vector<8x128xi32>
    %247 = arith.cmpi eq, %239, %246 : vector<8x128xi32>
    %248 = vector.shape_cast %238 : vector<8x1xf32> to vector<8x1xf32>
    %249 = vector.broadcast %248 : vector<8x1xf32> to vector<8x128xf32>
    %250 = arith.select %247, %249, %245 : vector<8x128xi1>, vector<8x128xf32>
    %c2_i32_56 = arith.constant 2 : i32
    %251 = vector.broadcast %c2_i32_56 : i32 to vector<8x128xi32>
    %252 = arith.cmpi eq, %239, %251 : vector<8x128xi32>
    %253 = vector.shape_cast %157 : vector<8x1xf32> to vector<8x1xf32>
    %254 = vector.broadcast %253 : vector<8x1xf32> to vector<8x128xf32>
    %255 = arith.select %252, %254, %250 : vector<8x128xi1>, vector<8x128xf32>
    %c0_57 = arith.constant 0 : index
    %c0_58 = arith.constant 0 : index
    %256 = vector.load %arg16[%c0_57, %c0_58] : memref<8x128xf32, #tpu.memory_space<vmem>>, vector<8x128xf32>
    tpu.vector_store %arg16[%c0_57, %c0_58], %255 {strides = array<i32>} : memref<8x128xf32, #tpu.memory_space<vmem>>, vector<8x128xf32>,
    return
  }
  func.func @transform_0(%arg0: i32) -> (i32, i32) {
    %c0_i32 = arith.constant 0 : i32
    %c0_i32_0 = arith.constant 0 : i32
    return %arg0, %c0_i32 : i32, i32
  }
  func.func @transform_1(%arg0: i32) -> (i32, i32) {
    %c0_i32 = arith.constant 0 : i32
    %c0_i32_0 = arith.constant 0 : i32
    return %arg0, %c0_i32 : i32, i32
  }
  func.func @transform_2(%arg0: i32) -> (i32, i32) {
    %c0_i32 = arith.constant 0 : i32
    %c0_i32_0 = arith.constant 0 : i32
    return %arg0, %c0_i32 : i32, i32
  }
  func.func @transform_3(%arg0: i32) -> (i32, i32) {
    %c0_i32 = arith.constant 0 : i32
    %c0_i32_0 = arith.constant 0 : i32
    %c0_i32_1 = arith.constant 0 : i32
    return %c0_i32, %c0_i32_0 : i32, i32
  }
  func.func @transform_4(%arg0: i32) -> (i32, i32) {
    %c0_i32 = arith.constant 0 : i32
    %c0_i32_0 = arith.constant 0 : i32
    %c0_i32_1 = arith.constant 0 : i32
    return %c0_i32, %c0_i32_0 : i32, i32
  }
  func.func @transform_5(%arg0: i32) -> (i32, i32) {
    %c0_i32 = arith.constant 0 : i32
    %c0_i32_0 = arith.constant 0 : i32
    %c0_i32_1 = arith.constant 0 : i32
    return %c0_i32, %c0_i32_0 : i32, i32
  }
  func.func @transform_6(%arg0: i32) -> (i32, i32) {
    %c0_i32 = arith.constant 0 : i32
    %c0_i32_0 = arith.constant 0 : i32
    %c0_i32_1 = arith.constant 0 : i32
    return %c0_i32, %c0_i32_0 : i32, i32
  }
  func.func @transform_7(%arg0: i32) -> (i32, i32) {
    %c0_i32 = arith.constant 0 : i32
    %c0_i32_0 = arith.constant 0 : i32
    %c0_i32_1 = arith.constant 0 : i32
    return %c0_i32, %c0_i32_0 : i32, i32
  }
  func.func @transform_8(%arg0: i32) -> (i32, i32) {
    %c0_i32 = arith.constant 0 : i32
    %c0_i32_0 = arith.constant 0 : i32
    %c0_i32_1 = arith.constant 0 : i32
    return %c0_i32, %c0_i32_0 : i32, i32
  }
  func.func @transform_9(%arg0: i32) -> (i32, i32) {
    %c0_i32 = arith.constant 0 : i32
    %c0_i32_0 = arith.constant 0 : i32
    %c0_i32_1 = arith.constant 0 : i32
    return %c0_i32, %c0_i32_0 : i32, i32
  }
  func.func @transform_10(%arg0: i32) -> (i32, i32) {
    %c0_i32 = arith.constant 0 : i32
    %c0_i32_0 = arith.constant 0 : i32
    %c0_i32_1 = arith.constant 0 : i32
    return %c0_i32, %c0_i32_0 : i32, i32
  }
  func.func @transform_11(%arg0: i32) -> (i32, i32) {
    %c0_i32 = arith.constant 0 : i32
    %c0_i32_0 = arith.constant 0 : i32
    %c0_i32_1 = arith.constant 0 : i32
    return %c0_i32, %c0_i32_0 : i32, i32
  }
  func.func @transform_12(%arg0: i32) -> (i32, i32) {
    %c0_i32 = arith.constant 0 : i32
    %c0_i32_0 = arith.constant 0 : i32
    %c0_i32_1 = arith.constant 0 : i32
    return %c0_i32, %c0_i32_0 : i32, i32
  }
  func.func @transform_13(%arg0: i32) -> (i32, i32) {
    %c0_i32 = arith.constant 0 : i32
    %c0_i32_0 = arith.constant 0 : i32
    %c0_i32_1 = arith.constant 0 : i32
    return %c0_i32, %c0_i32_0 : i32, i32
  }
  func.func @transform_14(%arg0: i32) -> (i32, i32) {
    %c0_i32 = arith.constant 0 : i32
    %c0_i32_0 = arith.constant 0 : i32
    %c0_i32_1 = arith.constant 0 : i32
    return %c0_i32, %c0_i32_0 : i32, i32
  }
  func.func @transform_15(%arg0: i32) -> (i32, i32) {
    %c0_i32 = arith.constant 0 : i32
    %c0_i32_0 = arith.constant 0 : i32
    return %arg0, %c0_i32 : i32, i32
  }
}

</mosaic_0001>

<llo_original>
// kernel: tpu_custom_call.1
$region0: #{tpu_custom_call.1}
  #allocation0 [shape = 'u32[]', space=smem, size = 0x4, offset = 0x4, fixed_abs, tag = 'smem constant byte address 0x4 - core index']
  #allocation1 [shape = 'u32[144,128]{1,0:T(1,128)}', space=vmem, size = 0x12000, scoped, tag = 'internal scratch']
  %s0 = inlined_call_operand.vmem [shape: f32[8,8], index: 0, kind: input, shape index: {}]
  %s1 = inlined_call_operand.vmem [shape: f32[8,16], index: 1, kind: input, shape index: {}]
  %s2 = inlined_call_operand.vmem [shape: s32[8,1], index: 2, kind: input, shape index: {}]
  %s3 = inlined_call_operand.vmem [shape: f32[8,100], index: 3, kind: input, shape index: {}]
  %s4 = inlined_call_operand.vmem [shape: f32[1,100], index: 4, kind: input, shape index: {}]
  %s5 = inlined_call_operand.vmem [shape: bf16[512,32], index: 5, kind: input, shape index: {}]
  %s6 = inlined_call_operand.vmem [shape: f32[16,32], index: 6, kind: input, shape index: {}]
  %s7 = inlined_call_operand.vmem [shape: bf16[32,128], index: 7, kind: input, shape index: {}]
  %s8 = inlined_call_operand.vmem [shape: f32[1,128], index: 8, kind: input, shape index: {}]
  %s9 = inlined_call_operand.vmem [shape: f32[8,97], index: 9, kind: input, shape index: {}]
  %s10 = inlined_call_operand.vmem [shape: f32[1,97], index: 10, kind: input, shape index: {}]
  %s11 = inlined_call_operand.vmem [shape: bf16[512,32], index: 11, kind: input, shape index: {}]
  %s12 = inlined_call_operand.vmem [shape: f32[16,32], index: 12, kind: input, shape index: {}]
  %s13 = inlined_call_operand.vmem [shape: bf16[32,32], index: 13, kind: input, shape index: {}]
  %s14 = inlined_call_operand.vmem [shape: f32[1,32], index: 14, kind: input, shape index: {}]
  %s15 = inlined_call_operand.hbm [shape: f32[8,128], index: 15, kind: output, shape index: {}]
  %s16 = sld [smem:[#allocation0]]
  $region70: #{tpu_custom_call.1} parent=0
    _
  %s18 = ssub.s32 1, %s16
  %s19 = scalar_select 0, %s18, %s16
  $region1: #{tpu_custom_call.1} parent=0
    #allocation2 [shape = 'u8[4096]{0}', space=vmem, size = 0x1000, scoped, tag = 'output window, operand 0, single buffered']
    #allocation3 [shape = 's32[1]{0}', space=sflag, size = 0x4, scoped, tag = 'scoped memory for tpu_custom_call.1']
    %20 = vsyncpa [#allocation3], 0
    // Predicated region
    $region2: #{tpu_custom_call.1} parent=1 // pred_check
      _
    $region3: #{tpu_custom_call.1} parent=1 // pred_check_branch
      %22 = sbr.rel (0) target = $region5
    $region4: #{tpu_custom_call.1} parent=1 // pred_region
      _
    $region5: #{tpu_custom_call.1} parent=1 // pred_fallthru
      _
    // Predicated region
    $region6: #{tpu_custom_call.1} parent=1 // pred_check
      _
    $region7: #{tpu_custom_call.1} parent=1 // pred_check_branch
      %24 = sbr.rel (0) target = $region9
    $region8: #{tpu_custom_call.1} parent=1 // pred_region
      _
    $region9: #{tpu_custom_call.1} parent=1 // pred_fallthru
      _
    // Predicated region
    $region10: #{tpu_custom_call.1} parent=1 // pred_check
      _
    $region11: #{tpu_custom_call.1} parent=1 // pred_check_branch
      %26 = sbr.rel (0) target = $region13
    $region12: #{tpu_custom_call.1} parent=1 // pred_region
      _
    $region13: #{tpu_custom_call.1} parent=1 // pred_fallthru
      _
    // Predicated region
    $region14: #{tpu_custom_call.1} parent=1 // pred_check
      _
    $region15: #{tpu_custom_call.1} parent=1 // pred_check_branch
      %28 = sbr.rel (0) target = $region17
    $region16: #{tpu_custom_call.1} parent=1 // pred_region
      _
    $region17: #{tpu_custom_call.1} parent=1 // pred_fallthru
      _
    // Predicated region
    $region18: #{tpu_custom_call.1} parent=1 // pred_check
      _
    $region19: #{tpu_custom_call.1} parent=1 // pred_check_branch
      %30 = sbr.rel (0) target = $region21
    $region20: #{tpu_custom_call.1} parent=1 // pred_region
      _
    $region21: #{tpu_custom_call.1} parent=1 // pred_fallthru
      _
    // Predicated region
    $region22: #{tpu_custom_call.1} parent=1 // pred_check
      _
    $region23: #{tpu_custom_call.1} parent=1 // pred_check_branch
      %32 = sbr.rel (0) target = $region25
    $region24: #{tpu_custom_call.1} parent=1 // pred_region
      _
    $region25: #{tpu_custom_call.1} parent=1 // pred_fallthru
      _
    // Predicated region
    $region26: #{tpu_custom_call.1} parent=1 // pred_check
      _
    $region27: #{tpu_custom_call.1} parent=1 // pred_check_branch
      %34 = sbr.rel (0) target = $region29
    $region28: #{tpu_custom_call.1} parent=1 // pred_region
      _
    $region29: #{tpu_custom_call.1} parent=1 // pred_fallthru
      _
    // Predicated region
    $region30: #{tpu_custom_call.1} parent=1 // pred_check
      _
    $region31: #{tpu_custom_call.1} parent=1 // pred_check_branch
      %36 = sbr.rel (0) target = $region33
    $region32: #{tpu_custom_call.1} parent=1 // pred_region
      _
    $region33: #{tpu_custom_call.1} parent=1 // pred_fallthru
      _
    // Predicated region
    $region34: #{tpu_custom_call.1} parent=1 // pred_check
      _
    $region35: #{tpu_custom_call.1} parent=1 // pred_check_branch
      %38 = sbr.rel (0) target = $region37
    $region36: #{tpu_custom_call.1} parent=1 // pred_region
      _
    $region37: #{tpu_custom_call.1} parent=1 // pred_fallthru
      _
    // Predicated region
    $region38: #{tpu_custom_call.1} parent=1 // pred_check
      _
    $region39: #{tpu_custom_call.1} parent=1 // pred_check_branch
      %40 = sbr.rel (0) target = $region41
    $region40: #{tpu_custom_call.1} parent=1 // pred_region
      _
    $region41: #{tpu_custom_call.1} parent=1 // pred_fallthru
      _
    // Predicated region
    $region42: #{tpu_custom_call.1} parent=1 // pred_check
      _
    $region43: #{tpu_custom_call.1} parent=1 // pred_check_branch
      %42 = sbr.rel (0) target = $region45
    $region44: #{tpu_custom_call.1} parent=1 // pred_region
      _
    $region45: #{tpu_custom_call.1} parent=1 // pred_fallthru
      _
    // Predicated region
    $region46: #{tpu_custom_call.1} parent=1 // pred_check
      _
    $region47: #{tpu_custom_call.1} parent=1 // pred_check_branch
      %44 = sbr.rel (0) target = $region49
    $region48: #{tpu_custom_call.1} parent=1 // pred_region
      _
    $region49: #{tpu_custom_call.1} parent=1 // pred_fallthru
      _
    // Predicated region
    $region50: #{tpu_custom_call.1} parent=1 // pred_check
      _
    $region51: #{tpu_custom_call.1} parent=1 // pred_check_branch
      %46 = sbr.rel (0) target = $region53
    $region52: #{tpu_custom_call.1} parent=1 // pred_region
      _
    $region53: #{tpu_custom_call.1} parent=1 // pred_fallthru
      _
    // Predicated region
    $region54: #{tpu_custom_call.1} parent=1 // pred_check
      _
    $region55: #{tpu_custom_call.1} parent=1 // pred_check_branch
      %48 = sbr.rel (0) target = $region57
    $region56: #{tpu_custom_call.1} parent=1 // pred_region
      _
    $region57: #{tpu_custom_call.1} parent=1 // pred_fallthru
      _
    // Predicated region
    $region58: #{tpu_custom_call.1} parent=1 // pred_check
      _
    $region59: #{tpu_custom_call.1} parent=1 // pred_check_branch
      %50 = sbr.rel (0) target = $region61
    $region60: #{tpu_custom_call.1} parent=1 // pred_region
      _
    $region61: #{tpu_custom_call.1} parent=1 // pred_fallthru
      _
    %v52 = vld [vmem:[%s0] sm:$0xff]
    %v53 = vld [vmem:[%s1] sm:$0xff]
    %v54 = vld [vmem:[%s2] sm:$0xff]
    %v55 = vld [vmem:[%s3] sm:$0xff]
    %v56 = vld [vmem:[%s4] sm:$0x1]
    %v57 = vld [vmem:[%s5] sm:$0xf]
    %v58 = vld [vmem:[%s5 + $0x4] sm:$0xf]
    %v59 = vld [vmem:[%s5 + $0x8] sm:$0xf]
    %v60 = vld [vmem:[%s5 + $0xc] sm:$0xf]
    %v61 = vld [vmem:[%s5 + $0x10] sm:$0xf]
    %v62 = vld [vmem:[%s5 + $0x14] sm:$0xf]
    %v63 = vld [vmem:[%s5 + $0x18] sm:$0xf]
    %v64 = vld [vmem:[%s5 + $0x1c] sm:$0xf]
    %v65 = vld [vmem:[%s5 + $0x20] sm:$0xf]
    %v66 = vld [vmem:[%s5 + $0x24] sm:$0xf]
    %v67 = vld [vmem:[%s5 + $0x28] sm:$0xf]
    %v68 = vld [vmem:[%s5 + $0x2c] sm:$0xf]
    %v69 = vld [vmem:[%s5 + $0x30] sm:$0xf]
    %v70 = vld [vmem:[%s5 + $0x34] sm:$0xf]
    %v71 = vld [vmem:[%s5 + $0x38] sm:$0xf]
    %v72 = vld [vmem:[%s5 + $0x3c] sm:$0xf]
    %v73 = vld [vmem:[%s5 + $0x40] sm:$0xf]
    %v74 = vld [vmem:[%s5 + $0x44] sm:$0xf]
    %v75 = vld [vmem:[%s5 + $0x48] sm:$0xf]
    %v76 = vld [vmem:[%s5 + $0x4c] sm:$0xf]
    %v77 = vld [vmem:[%s5 + $0x50] sm:$0xf]
    %v78 = vld [vmem:[%s5 + $0x54] sm:$0xf]
    %v79 = vld [vmem:[%s5 + $0x58] sm:$0xf]
    %v80 = vld [vmem:[%s5 + $0x5c] sm:$0xf]
    %v81 = vld [vmem:[%s5 + $0x60] sm:$0xf]
    %v82 = vld [vmem:[%s5 + $0x64] sm:$0xf]
    %v83 = vld [vmem:[%s5 + $0x68] sm:$0xf]
    %v84 = vld [vmem:[%s5 + $0x6c] sm:$0xf]
    %v85 = vld [vmem:[%s5 + $0x70] sm:$0xf]
    %v86 = vld [vmem:[%s5 + $0x74] sm:$0xf]
    %v87 = vld [vmem:[%s5 + $0x78] sm:$0xf]
    %v88 = vld [vmem:[%s5 + $0x7c] sm:$0xf]
    %v89 = vld [vmem:[%s5 + $0x80] sm:$0xf]
    %v90 = vld [vmem:[%s5 + $0x84] sm:$0xf]
    %v91 = vld [vmem:[%s5 + $0x88] sm:$0xf]
    %v92 = vld [vmem:[%s5 + $0x8c] sm:$0xf]
    %v93 = vld [vmem:[%s5 + $0x90] sm:$0xf]
    %v94 = vld [vmem:[%s5 + $0x94] sm:$0xf]
    %v95 = vld [vmem:[%s5 + $0x98] sm:$0xf]
    %v96 = vld [vmem:[%s5 + $0x9c] sm:$0xf]
    %v97 = vld [vmem:[%s5 + $0xa0] sm:$0xf]
    %v98 = vld [vmem:[%s5 + $0xa4] sm:$0xf]
    %v99 = vld [vmem:[%s5 + $0xa8] sm:$0xf]
    %v100 = vld [vmem:[%s5 + $0xac] sm:$0xf]
    %v101 = vld [vmem:[%s5 + $0xb0] sm:$0xf]
    %v102 = vld [vmem:[%s5 + $0xb4] sm:$0xf]
    %v103 = vld [vmem:[%s5 + $0xb8] sm:$0xf]
    %v104 = vld [vmem:[%s5 + $0xbc] sm:$0xf]
    %v105 = vld [vmem:[%s5 + $0xc0] sm:$0xf]
    %v106 = vld [vmem:[%s5 + $0xc4] sm:$0xf]
    %v107 = vld [vmem:[%s5 + $0xc8] sm:$0xf]
    %v108 = vld [vmem:[%s5 + $0xcc] sm:$0xf]
    %v109 = vld [vmem:[%s5 + $0xd0] sm:$0xf]
    %v110 = vld [vmem:[%s5 + $0xd4] sm:$0xf]
    %v111 = vld [vmem:[%s5 + $0xd8] sm:$0xf]
    %v112 = vld [vmem:[%s5 + $0xdc] sm:$0xf]
    %v113 = vld [vmem:[%s5 + $0xe0] sm:$0xf]
    %v114 = vld [vmem:[%s5 + $0xe4] sm:$0xf]
    %v115 = vld [vmem:[%s5 + $0xe8] sm:$0xf]
    %v116 = vld [vmem:[%s5 + $0xec] sm:$0xf]
    %v117 = vld [vmem:[%s5 + $0xf0] sm:$0xf]
    %v118 = vld [vmem:[%s5 + $0xf4] sm:$0xf]
    %v119 = vld [vmem:[%s5 + $0xf8] sm:$0xf]
    %v120 = vld [vmem:[%s5 + $0xfc] sm:$0xf]
    %v121 = vld [vmem:[%s6] sm:$0xff]
    %v122 = vld [vmem:[%s6 + $0x8] sm:$0xff]
    %v123 = vld [vmem:[%s7] sm:$0xf]
    %v124 = vld [vmem:[%s7 + $0x4] sm:$0xf]
    %v125 = vld [vmem:[%s7 + $0x8] sm:$0xf]
    %v126 = vld [vmem:[%s7 + $0xc] sm:$0xf]
    %v127 = vld [vmem:[%s8] sm:$0x1]
    %v129 = vlaneseq
    %v130 = vshrl.u32 %v129, 7
    %v131 = vsub.s32 0, %v130
    %v132 = vrot.slane %v56, %v131
    %vm134 = vcmask 64512
    %v136 = vsel %vm134, %v52, 0
    %138 = vmatprep.subr.mxu0 0.0
    %139 = vmatpush1.msra.mxu0 %v55
    %140 = vmatprep.subr.mxu0 0.0
    %141 = vmatpush1.msra.mxu0 0.0
    %142 = vmatprep.subr.mxu0 0.0
    %143 = vmatpush1.msra.mxu0 0.0
    %144 = vmatprep.subr.mxu0 0.0
    %145 = vmatpush1.msra.mxu0 0.0
    %146 = vmatprep.subr.mxu0 0.0
    %147 = vmatpush1.msra.mxu0 0.0
    %148 = vmatprep.subr.mxu0 0.0
    %149 = vmatpush1.msra.mxu0 0.0
    %150 = vmatprep.subr.mxu0 0.0
    %151 = vmatpush1.msra.mxu0 0.0
    %152 = vmatprep.subr.mxu0 0.0
    %153 = vmatpush1.msra.mxu0 0.0
    %154 = vmatprep.subr.mxu0 0.0
    %155 = vmatpush1.msra.mxu0 0.0
    %156 = vmatprep.subr.mxu0 0.0
    %157 = vmatpush1.msra.mxu0 0.0
    %158 = vmatprep.subr.mxu0 0.0
    %159 = vmatpush1.msra.mxu0 0.0
    %160 = vmatprep.subr.mxu0 0.0
    %161 = vmatpush1.msra.mxu0 0.0
    %162 = vmatprep.subr.mxu0 0.0
    %163 = vmatpush1.msra.mxu0 0.0
    %164 = vmatprep.subr.mxu0 0.0
    %165 = vmatpush1.msra.mxu0 0.0
    %166 = vmatprep.subr.mxu0 0.0
    %167 = vmatpush1.msra.mxu0 0.0
    %168 = vmatprep.subr.mxu0 0.0
    %169 = vmatpush1.msra.mxu0 0.0
    %170 = vmatprep.subr.mxu0 0.0
    %171 = vmatpush1.msra.mxu0 0.0
    %172 = vmatprep.subr.mxu0 0.0
    %173 = vmatpush1.msra.mxu0 0.0
    %174 = vmatprep.subr.mxu0 0.0
    %175 = vmatpush1.msra.mxu0 0.0
    %176 = vmatprep.subr.mxu0 0.0
    %177 = vmatpush1.msra.mxu0 0.0
    %178 = vmatprep.subr.mxu0 0.0
    %179 = vmatpush1.msra.mxu0 0.0
    %180 = vmatprep.subr.mxu0 0.0
    %181 = vmatpush1.msra.mxu0 0.0
    %182 = vmatprep.subr.mxu0 0.0
    %183 = vmatpush1.msra.mxu0 0.0
    %184 = vmatprep.subr.mxu0 0.0
    %185 = vmatpush1.msra.mxu0 0.0
    %186 = vmatprep.subr.mxu0 0.0
    %187 = vmatpush1.msra.mxu0 0.0
    %188 = vmatprep.subr.mxu0 0.0
    %189 = vmatpush1.msra.mxu0 0.0
    %190 = vmatprep.subr.mxu0 0.0
    %191 = vmatpush1.msra.mxu0 0.0
    %192 = vmatprep.subr.mxu0 0.0
    %193 = vmatpush1.msra.mxu0 0.0
    %194 = vmatprep.subr.mxu0 0.0
    %195 = vmatpush1.msra.mxu0 0.0
    %196 = vmatprep.subr.mxu0 0.0
    %197 = vmatpush1.msra.mxu0 0.0
    %198 = vmatprep.subr.mxu0 0.0
    %199 = vmatpush1.msra.mxu0 0.0
    %200 = vmatprep.subr.mxu0 0.0
    %201 = vmatpush1.msra.mxu0 0.0
    %202 = vmatprep.mubr.f32.mxu0 0.0
    %203 = vmatmul.mubr.f32.gmra.mrb[0].mxu0 %v136
    %v204 = vpop.f32.mrb[0].mxu0
    %v205 = vadd.f32 %v132, %v204
    %v206 = vpop.f32.mrb[0].mxu0
    %207 = vdwg.mxu0
    %v208 = vmax.f32 %v205, 0.0
    %210 = vset.pattern.permute.xlu0 0
    %211 = vperm.xlu0 %210, %v53
    %v212 = vpop.permute.xlu0 %211
    %v214 = vmul.f32 %v212, %v208
    %215 = vset.pattern.permute.xlu0 1
    %216 = vperm.xlu0 %215, %v53
    %v217 = vpop.permute.xlu0 %216
    %v219 = vmul.f32 %v217, %v208
    %220 = vset.pattern.permute.xlu0 2
    %221 = vperm.xlu0 %220, %v53
    %v222 = vpop.permute.xlu0 %221
    %v224 = vmul.f32 %v222, %v208
    %225 = vset.pattern.permute.xlu0 3
    %226 = vperm.xlu0 %225, %v53
    %v227 = vpop.permute.xlu0 %226
    %v229 = vmul.f32 %v227, %v208
    %230 = vset.pattern.permute.xlu0 4
    %231 = vperm.xlu0 %230, %v53
    %v232 = vpop.permute.xlu0 %231
    %v234 = vmul.f32 %v232, %v208
    %235 = vset.pattern.permute.xlu0 5
    %236 = vperm.xlu0 %235, %v53
    %v237 = vpop.permute.xlu0 %236
    %v239 = vmul.f32 %v237, %v208
    %240 = vset.pattern.permute.xlu0 6
    %241 = vperm.xlu0 %240, %v53
    %v242 = vpop.permute.xlu0 %241
    %v244 = vmul.f32 %v242, %v208
    %245 = vset.pattern.permute.xlu0 7
    %246 = vperm.xlu0 %245, %v53
    %v247 = vpop.permute.xlu0 %246
    %v249 = vmul.f32 %v247, %v208
    %250 = vset.pattern.permute.xlu0 8
    %251 = vperm.xlu0 %250, %v53
    %v252 = vpop.permute.xlu0 %251
    %v254 = vmul.f32 %v252, %v208
    %255 = vset.pattern.permute.xlu0 9
    %256 = vperm.xlu0 %255, %v53
    %v257 = vpop.permute.xlu0 %256
    %v259 = vmul.f32 %v257, %v208
    %260 = vset.pattern.permute.xlu0 10
    %261 = vperm.xlu0 %260, %v53
    %v262 = vpop.permute.xlu0 %261
    %v264 = vmul.f32 %v262, %v208
    %265 = vset.pattern.permute.xlu0 11
    %266 = vperm.xlu0 %265, %v53
    %v267 = vpop.permute.xlu0 %266
    %v269 = vmul.f32 %v267, %v208
    %270 = vset.pattern.permute.xlu0 12
    %271 = vperm.xlu0 %270, %v53
    %v272 = vpop.permute.xlu0 %271
    %v274 = vmul.f32 %v272, %v208
    %275 = vset.pattern.permute.xlu0 13
    %276 = vperm.xlu0 %275, %v53
    %v277 = vpop.permute.xlu0 %276
    %v279 = vmul.f32 %v277, %v208
    %280 = vset.pattern.permute.xlu0 14
    %281 = vperm.xlu0 %280, %v53
    %v282 = vpop.permute.xlu0 %281
    %v284 = vmul.f32 %v282, %v208
    %285 = vset.pattern.permute.xlu0 15
    %286 = vperm.xlu0 %285, %v53
    %v287 = vpop.permute.xlu0 %286
    %v289 = vmul.f32 %v287, %v208
    %291 = vrot.lane.b32.xlu0 %v219, 32
    %v292 = vpop.permute.xlu0 %291
    %295 = vrot.lane.b32.xlu0 %v224, 64
    %v296 = vpop.permute.xlu0 %295
    %299 = vrot.lane.b32.xlu0 %v229, 96
    %v300 = vpop.permute.xlu0 %299
    %303 = vrot.lane.b32.xlu0 %v239, 32
    %v304 = vpop.permute.xlu0 %303
    %307 = vrot.lane.b32.xlu0 %v244, 64
    %v308 = vpop.permute.xlu0 %307
    %311 = vrot.lane.b32.xlu0 %v249, 96
    %v312 = vpop.permute.xlu0 %311
    %315 = vrot.lane.b32.xlu0 %v259, 32
    %v316 = vpop.permute.xlu0 %315
    %319 = vrot.lane.b32.xlu0 %v264, 64
    %v320 = vpop.permute.xlu0 %319
    %323 = vrot.lane.b32.xlu0 %v269, 96
    %v324 = vpop.permute.xlu0 %323
    %327 = vrot.lane.b32.xlu0 %v279, 32
    %v328 = vpop.permute.xlu0 %327
    %331 = vrot.lane.b32.xlu0 %v284, 64
    %v332 = vpop.permute.xlu0 %331
    %335 = vrot.lane.b32.xlu0 %v289, 96
    %v336 = vpop.permute.xlu0 %335
    %vm338 = vcmask 261120
    %v339 = vsel %vm338, %v214, %v292
    %vm340 = vcmask 523264
    %v341 = vsel %vm340, %v339, %v296
    %vm342 = vcmask 785408
    %v343 = vsel %vm342, %v341, %v300
    %v344 = vsel %vm338, %v234, %v304
    %v345 = vsel %vm340, %v344, %v308
    %v346 = vsel %vm342, %v345, %v312
    %v347 = vsel %vm338, %v254, %v316
    %v348 = vsel %vm340, %v347, %v320
    %v349 = vsel %vm342, %v348, %v324
    %v350 = vsel %vm338, %v274, %v328
    %v351 = vsel %vm340, %v350, %v332
    %v352 = vsel %vm342, %v351, %v336
    %v353 = vpack.c.bf16 %v343, %v343
    %v354 = vpack.c.bf16 %v346, %v346
    %v355 = vpack.c.bf16 %v349, %v349
    %v356 = vpack.c.bf16 %v352, %v352
    %vm357 = vcmask 130048
    %v358 = vsel %vm357, %v53, 0
    %360 = vmatprep.subr.mxu0 0.0
    %361 = vmatpush1.msra.mxu0 %v121
    %362 = vmatprep.subr.mxu0 0.0
    %363 = vmatpush1.msra.mxu0 %v122
    %364 = vmatprep.subr.mxu0 0.0
    %365 = vmatpush1.msra.mxu0 0.0
    %366 = vmatprep.subr.mxu0 0.0
    %367 = vmatpush1.msra.mxu0 0.0
    %368 = vmatprep.subr.mxu0 0.0
    %369 = vmatpush1.msra.mxu0 0.0
    %370 = vmatprep.subr.mxu0 0.0
    %371 = vmatpush1.msra.mxu0 0.0
    %372 = vmatprep.subr.mxu0 0.0
    %373 = vmatpush1.msra.mxu0 0.0
    %374 = vmatprep.subr.mxu0 0.0
    %375 = vmatpush1.msra.mxu0 0.0
    %376 = vmatprep.subr.mxu0 0.0
    %377 = vmatpush1.msra.mxu0 0.0
    %378 = vmatprep.subr.mxu0 0.0
    %379 = vmatpush1.msra.mxu0 0.0
    %380 = vmatprep.subr.mxu0 0.0
    %381 = vmatpush1.msra.mxu0 0.0
    %382 = vmatprep.subr.mxu0 0.0
    %383 = vmatpush1.msra.mxu0 0.0
    %384 = vmatprep.subr.mxu0 0.0
    %385 = vmatpush1.msra.mxu0 0.0
    %386 = vmatprep.subr.mxu0 0.0
    %387 = vmatpush1.msra.mxu0 0.0
    %388 = vmatprep.subr.mxu0 0.0
    %389 = vmatpush1.msra.mxu0 0.0
    %390 = vmatprep.subr.mxu0 0.0
    %391 = vmatpush1.msra.mxu0 0.0
    %392 = vmatprep.subr.mxu0 0.0
    %393 = vmatpush1.msra.mxu0 0.0
    %394 = vmatprep.subr.mxu0 0.0
    %395 = vmatpush1.msra.mxu0 0.0
    %396 = vmatprep.subr.mxu0 0.0
    %397 = vmatpush1.msra.mxu0 0.0
    %398 = vmatprep.subr.mxu0 0.0
    %399 = vmatpush1.msra.mxu0 0.0
    %400 = vmatprep.subr.mxu0 0.0
    %401 = vmatpush1.msra.mxu0 0.0
    %402 = vmatprep.subr.mxu0 0.0
    %403 = vmatpush1.msra.mxu0 0.0
    %404 = vmatprep.subr.mxu0 0.0
    %405 = vmatpush1.msra.mxu0 0.0
    %406 = vmatprep.subr.mxu0 0.0
    %407 = vmatpush1.msra.mxu0 0.0
    %408 = vmatprep.subr.mxu0 0.0
    %409 = vmatpush1.msra.mxu0 0.0
    %410 = vmatprep.subr.mxu0 0.0
    %411 = vmatpush1.msra.mxu0 0.0
    %412 = vmatprep.subr.mxu0 0.0
    %413 = vmatpush1.msra.mxu0 0.0
    %414 = vmatprep.subr.mxu0 0.0
    %415 = vmatpush1.msra.mxu0 0.0
    %416 = vmatprep.subr.mxu0 0.0
    %417 = vmatpush1.msra.mxu0 0.0
    %418 = vmatprep.subr.mxu0 0.0
    %419 = vmatpush1.msra.mxu0 0.0
    %420 = vmatprep.subr.mxu0 0.0
    %421 = vmatpush1.msra.mxu0 0.0
    %422 = vmatprep.subr.mxu0 0.0
    %423 = vmatpush1.msra.mxu0 0.0
    %424 = vmatprep.mubr.f32.mxu0 0.0
    %425 = vmatmul.mubr.f32.gmra.mrb[0].mxu0 %v358
    %v426 = vpop.f32.mrb[0].mxu0
    %v427 = vadd.f32 0.0, %v426
    %v428 = vpop.f32.mrb[0].mxu0
    %429 = vdwg.mxu0
    %v494 = vunpack.c.l.b16 %v57
    %v495 = vunpack.c.l.b16 %v58
    %v496 = vunpack.c.l.b16 %v59
    %v497 = vunpack.c.l.b16 %v60
    %v498 = vunpack.c.l.b16 %v61
    %v499 = vunpack.c.l.b16 %v62
    %v500 = vunpack.c.l.b16 %v63
    %v501 = vunpack.c.l.b16 %v64
    %v502 = vunpack.c.l.b16 %v65
    %v503 = vunpack.c.l.b16 %v66
    %v504 = vunpack.c.l.b16 %v67
    %v505 = vunpack.c.l.b16 %v68
    %v506 = vunpack.c.l.b16 %v69
    %v507 = vunpack.c.l.b16 %v70
    %v508 = vunpack.c.l.b16 %v71
    %v509 = vunpack.c.l.b16 %v72
    %v510 = vunpack.c.l.b16 %v73
    %v511 = vunpack.c.l.b16 %v74
    %v512 = vunpack.c.l.b16 %v75
    %v513 = vunpack.c.l.b16 %v76
    %v514 = vunpack.c.l.b16 %v77
    %v515 = vunpack.c.l.b16 %v78
    %v516 = vunpack.c.l.b16 %v79
    %v517 = vunpack.c.l.b16 %v80
    %v518 = vunpack.c.l.b16 %v81
    %v519 = vunpack.c.l.b16 %v82
    %v520 = vunpack.c.l.b16 %v83
    %v521 = vunpack.c.l.b16 %v84
    %v522 = vunpack.c.l.b16 %v85
    %v523 = vunpack.c.l.b16 %v86
    %v524 = vunpack.c.l.b16 %v87
    %v525 = vunpack.c.l.b16 %v88
    %v526 = vunpack.c.l.b16 %v89
    %v527 = vunpack.c.l.b16 %v90
    %v528 = vunpack.c.l.b16 %v91
    %v529 = vunpack.c.l.b16 %v92
    %v530 = vunpack.c.l.b16 %v93
    %v531 = vunpack.c.l.b16 %v94
    %v532 = vunpack.c.l.b16 %v95
    %v533 = vunpack.c.l.b16 %v96
    %v534 = vunpack.c.l.b16 %v97
    %v535 = vunpack.c.l.b16 %v98
    %v536 = vunpack.c.l.b16 %v99
    %v537 = vunpack.c.l.b16 %v100
    %v538 = vunpack.c.l.b16 %v101
    %v539 = vunpack.c.l.b16 %v102
    %v540 = vunpack.c.l.b16 %v103
    %v541 = vunpack.c.l.b16 %v104
    %v542 = vunpack.c.l.b16 %v105
    %v543 = vunpack.c.l.b16 %v106
    %v544 = vunpack.c.l.b16 %v107
    %v545 = vunpack.c.l.b16 %v108
    %v546 = vunpack.c.l.b16 %v109
    %v547 = vunpack.c.l.b16 %v110
    %v548 = vunpack.c.l.b16 %v111
    %v549 = vunpack.c.l.b16 %v112
    %v550 = vunpack.c.l.b16 %v113
    %v551 = vunpack.c.l.b16 %v114
    %v552 = vunpack.c.l.b16 %v115
    %v553 = vunpack.c.l.b16 %v116
    %v554 = vunpack.c.l.b16 %v117
    %v555 = vunpack.c.l.b16 %v118
    %v556 = vunpack.c.l.b16 %v119
    %v557 = vunpack.c.l.b16 %v120
    %v558 = vpack.c.b16 %v495, %v494
    %v559 = vpack.c.b16 %v497, %v496
    %v560 = vpack.c.b16 %v499, %v498
    %v561 = vpack.c.b16 %v501, %v500
    %v562 = vpack.c.b16 %v503, %v502
    %v563 = vpack.c.b16 %v505, %v504
    %v564 = vpack.c.b16 %v507, %v506
    %v565 = vpack.c.b16 %v509, %v508
    %v566 = vpack.c.b16 %v511, %v510
    %v567 = vpack.c.b16 %v513, %v512
    %v568 = vpack.c.b16 %v515, %v514
    %v569 = vpack.c.b16 %v517, %v516
    %v570 = vpack.c.b16 %v519, %v518
    %v571 = vpack.c.b16 %v521, %v520
    %v572 = vpack.c.b16 %v523, %v522
    %v573 = vpack.c.b16 %v525, %v524
    %v574 = vpack.c.b16 %v527, %v526
    %v575 = vpack.c.b16 %v529, %v528
    %v576 = vpack.c.b16 %v531, %v530
    %v577 = vpack.c.b16 %v533, %v532
    %v578 = vpack.c.b16 %v535, %v534
    %v579 = vpack.c.b16 %v537, %v536
    %v580 = vpack.c.b16 %v539, %v538
    %v581 = vpack.c.b16 %v541, %v540
    %v582 = vpack.c.b16 %v543, %v542
    %v583 = vpack.c.b16 %v545, %v544
    %v584 = vpack.c.b16 %v547, %v546
    %v585 = vpack.c.b16 %v549, %v548
    %v586 = vpack.c.b16 %v551, %v550
    %v587 = vpack.c.b16 %v553, %v552
    %v588 = vpack.c.b16 %v555, %v554
    %v589 = vpack.c.b16 %v557, %v556
    %622 = vmatprep.subr.bf16.mxu0 0
    %623 = vmatpush1.bf16.msra.mxu0 %v558
    %624 = vmatprep.subr.bf16.mxu0 0
    %625 = vmatpush1.bf16.msra.mxu0 %v559
    %626 = vmatprep.subr.bf16.mxu0 0
    %627 = vmatpush1.bf16.msra.mxu0 %v560
    %628 = vmatprep.subr.bf16.mxu0 0
    %629 = vmatpush1.bf16.msra.mxu0 %v561
    %630 = vmatprep.subr.bf16.mxu0 0
    %631 = vmatpush1.bf16.msra.mxu0 %v562
    %632 = vmatprep.subr.bf16.mxu0 0
    %633 = vmatpush1.bf16.msra.mxu0 %v563
    %634 = vmatprep.subr.bf16.mxu0 0
    %635 = vmatpush1.bf16.msra.mxu0 %v564
    %636 = vmatprep.subr.bf16.mxu0 0
    %637 = vmatpush1.bf16.msra.mxu0 %v565
    %638 = vmatprep.subr.bf16.mxu0 0
    %639 = vmatpush1.bf16.msra.mxu0 %v566
    %640 = vmatprep.subr.bf16.mxu0 0
    %641 = vmatpush1.bf16.msra.mxu0 %v567
    %642 = vmatprep.subr.bf16.mxu0 0
    %643 = vmatpush1.bf16.msra.mxu0 %v568
    %644 = vmatprep.subr.bf16.mxu0 0
    %645 = vmatpush1.bf16.msra.mxu0 %v569
    %646 = vmatprep.subr.bf16.mxu0 0
    %647 = vmatpush1.bf16.msra.mxu0 %v570
    %648 = vmatprep.subr.bf16.mxu0 0
    %649 = vmatpush1.bf16.msra.mxu0 %v571
    %650 = vmatprep.subr.bf16.mxu0 0
    %651 = vmatpush1.bf16.msra.mxu0 %v572
    %652 = vmatprep.subr.bf16.mxu0 0
    %653 = vmatpush1.bf16.msra.mxu0 %v573
    %654 = vmatprep.mubr.bf16.mxu0 %v354
    %655 = vmatmul.mubr.bf16.gmra.mrb[0].mxu0 %v353
    %v656 = vpop.f32.mrb[0].mxu0
    %v657 = vadd.f32 %v427, %v656
    %v658 = vpop.f32.mrb[0].mxu0
    %v659 = vpop.f32.mrb[0].mxu0
    %v660 = vpop.f32.mrb[0].mxu0
    %661 = vdwg.mxu0
    %662 = vmatprep.subr.bf16.mxu0 0
    %663 = vmatpush1.bf16.msra.mxu0 %v574
    %664 = vmatprep.subr.bf16.mxu0 0
    %665 = vmatpush1.bf16.msra.mxu0 %v575
    %666 = vmatprep.subr.bf16.mxu0 0
    %667 = vmatpush1.bf16.msra.mxu0 %v576
    %668 = vmatprep.subr.bf16.mxu0 0
    %669 = vmatpush1.bf16.msra.mxu0 %v577
    %670 = vmatprep.subr.bf16.mxu0 0
    %671 = vmatpush1.bf16.msra.mxu0 %v578
    %672 = vmatprep.subr.bf16.mxu0 0
    %673 = vmatpush1.bf16.msra.mxu0 %v579
    %674 = vmatprep.subr.bf16.mxu0 0
    %675 = vmatpush1.bf16.msra.mxu0 %v580
    %676 = vmatprep.subr.bf16.mxu0 0
    %677 = vmatpush1.bf16.msra.mxu0 %v581
    %678 = vmatprep.subr.bf16.mxu0 0
    %679 = vmatpush1.bf16.msra.mxu0 %v582
    %680 = vmatprep.subr.bf16.mxu0 0
    %681 = vmatpush1.bf16.msra.mxu0 %v583
    %682 = vmatprep.subr.bf16.mxu0 0
    %683 = vmatpush1.bf16.msra.mxu0 %v584
    %684 = vmatprep.subr.bf16.mxu0 0
    %685 = vmatpush1.bf16.msra.mxu0 %v585
    %686 = vmatprep.subr.bf16.mxu0 0
    %687 = vmatpush1.bf16.msra.mxu0 %v586
    %688 = vmatprep.subr.bf16.mxu0 0
    %689 = vmatpush1.bf16.msra.mxu0 %v587
    %690 = vmatprep.subr.bf16.mxu0 0
    %691 = vmatpush1.bf16.msra.mxu0 %v588
    %692 = vmatprep.subr.bf16.mxu0 0
    %693 = vmatpush1.bf16.msra.mxu0 %v589
    %694 = vmatprep.mubr.bf16.mxu0 %v356
    %695 = vmatmul.mubr.bf16.gmra.mrb[0].mxu0 %v355
    %v696 = vpop.f32.mrb[0].mxu0
    %v697 = vadd.f32 %v657, %v696
    %v698 = vpop.f32.mrb[0].mxu0
    %v699 = vpop.f32.mrb[0].mxu0
    %v700 = vpop.f32.mrb[0].mxu0
    %701 = vdwg.mxu0
    %703 = vrot.lane.b32.xlu0 %v205, 64
    %v704 = vpop.permute.xlu0 %703
    %v706 = vadd.f32 %v697, %v704
    %v707 = vmax.f32 %v706, 0.0
    %v708 = vpack.c.bf16 %v208, %v208
    %v710 = vlaneseq
    %v711 = vshrl.u32 %v710, 7
    %v712 = vsub.s32 0, %v711
    %v713 = vrot.slane %v127, %v712
    %716 = vrot.lane.b32.xlu0 %v708, 96
    %v717 = vpop.permute.xlu0 %716
    %v722 = vunpack.c.l.b16 %v123
    %v723 = vunpack.c.l.b16 %v124
    %v724 = vunpack.c.l.b16 %v125
    %v725 = vunpack.c.l.b16 %v126
    %v726 = vpack.c.b16 %v723, %v722
    %v727 = vpack.c.b16 %v725, %v724
    %v731 = vsel %vm338, %v717, 0
    %733 = vmatprep.subr.bf16.mxu0 0
    %734 = vmatpush1.bf16.msra.mxu0 %v726
    %735 = vmatprep.subr.bf16.mxu0 0
    %736 = vmatpush1.bf16.msra.mxu0 %v727
    %737 = vmatprep.subr.bf16.mxu0 0
    %738 = vmatpush1.bf16.msra.mxu0 0
    %739 = vmatprep.subr.bf16.mxu0 0
    %740 = vmatpush1.bf16.msra.mxu0 0
    %741 = vmatprep.subr.bf16.mxu0 0
    %742 = vmatpush1.bf16.msra.mxu0 0
    %743 = vmatprep.subr.bf16.mxu0 0
    %744 = vmatpush1.bf16.msra.mxu0 0
    %745 = vmatprep.subr.bf16.mxu0 0
    %746 = vmatpush1.bf16.msra.mxu0 0
    %747 = vmatprep.subr.bf16.mxu0 0
    %748 = vmatpush1.bf16.msra.mxu0 0
    %749 = vmatprep.subr.bf16.mxu0 0
    %750 = vmatpush1.bf16.msra.mxu0 0
    %751 = vmatprep.subr.bf16.mxu0 0
    %752 = vmatpush1.bf16.msra.mxu0 0
    %753 = vmatprep.subr.bf16.mxu0 0
    %754 = vmatpush1.bf16.msra.mxu0 0
    %755 = vmatprep.subr.bf16.mxu0 0
    %756 = vmatpush1.bf16.msra.mxu0 0
    %757 = vmatprep.subr.bf16.mxu0 0
    %758 = vmatpush1.bf16.msra.mxu0 0
    %759 = vmatprep.subr.bf16.mxu0 0
    %760 = vmatpush1.bf16.msra.mxu0 0
    %761 = vmatprep.subr.bf16.mxu0 0
    %762 = vmatpush1.bf16.msra.mxu0 0
    %763 = vmatprep.subr.bf16.mxu0 0
    %764 = vmatpush1.bf16.msra.mxu0 0
    %765 = vmatprep.mubr.bf16.mxu0 0
    %766 = vmatmul.mubr.bf16.gmra.mrb[0].mxu0 %v731
    %v767 = vpop.f32.mrb[0].mxu0
    %v768 = vadd.f32 %v713, %v767
    %v769 = vpop.f32.mrb[0].mxu0
    %v770 = vpop.f32.mrb[0].mxu0
    %v771 = vpop.f32.mrb[0].mxu0
    %772 = vdwg.mxu0
    %v773 = vmul.f32 %v707, %v768
    %v774 = vsel %vm338, %v773, 0.0
    %775 = vadd.xlane.f32.xlu0 %v774
    %v776 = vpop.xlane.xlu0 %775
    %v777 = vadd.f32 %v776, %v205
    %779 = vrot.lane.b32.xlu0 %v768, 96
    %v780 = vpop.permute.xlu0 %779
    %v782 = vmul.f32 %v707, %v780
    %v783 = vsel %vm338, %v782, 0.0
    %784 = vadd.xlane.f32.xlu0 %v783
    %v785 = vpop.xlane.xlu0 %784
    %v786 = vadd.f32 %v785, %v205
    %787 = vrot.lane.b32.xlu0 %v768, 64
    %v788 = vpop.permute.xlu0 %787
    %v790 = vmul.f32 %v707, %v788
    %v791 = vsel %vm338, %v790, 0.0
    %792 = vadd.xlane.f32.xlu0 %v791
    %v793 = vpop.xlane.xlu0 %792
    %v794 = vadd.f32 %v793, %v205
    %795 = vrot.lane.b32.xlu0 %v768, 32
    %v796 = vpop.permute.xlu0 %795
    %v798 = vmul.f32 %v707, %v796
    %v799 = vsel %vm338, %v798, 0.0
    %800 = vadd.xlane.f32.xlu0 %v799
    %v801 = vpop.xlane.xlu0 %800
    %v802 = vadd.f32 %v801, %v205
    %804 = vrot.lane.b32.xlu0 %v786, 127
    %v805 = vpop.permute.xlu0 %804
    %v807 = vmax.f32 %v777, %v805
    %809 = vrot.lane.b32.xlu0 %v794, 126
    %v810 = vpop.permute.xlu0 %809
    %v812 = vmax.f32 %v807, %v810
    %814 = vrot.lane.b32.xlu0 %v802, 125
    %v815 = vpop.permute.xlu0 %814
    %v817 = vmax.f32 %v812, %v815
    %v818 = vsub.f32 %v777, %v817
    %v819 = vmul.f32 %v818, 1.442695
    %v820 = vpow.pop %v819
    %822 = vrot.lane.b32.xlu0 %v817, 1
    %v823 = vpop.permute.xlu0 %822
    %v825 = vsub.f32 %v786, %v823
    %v826 = vmul.f32 %v825, 1.442695
    %v827 = vpow.pop %v826
    %829 = vrot.lane.b32.xlu0 %v827, 127
    %v830 = vpop.permute.xlu0 %829
    %v832 = vadd.f32 %v820, %v830
    %833 = vrot.lane.b32.xlu0 %v817, 2
    %v834 = vpop.permute.xlu0 %833
    %v836 = vsub.f32 %v794, %v834
    %v837 = vmul.f32 %v836, 1.442695
    %v838 = vpow.pop %v837
    %840 = vrot.lane.b32.xlu0 %v838, 126
    %v841 = vpop.permute.xlu0 %840
    %v843 = vadd.f32 %v832, %v841
    %844 = vrot.lane.b32.xlu0 %v817, 3
    %v845 = vpop.permute.xlu0 %844
    %v847 = vsub.f32 %v802, %v845
    %v848 = vmul.f32 %v847, 1.442695
    %v849 = vpow.pop %v848
    %851 = vrot.lane.b32.xlu0 %v849, 125
    %v852 = vpop.permute.xlu0 %851
    %v854 = vadd.f32 %v843, %v852
    %v855 = vlog2.pop %v854
    %v856 = vmul.f32 %v855, 0.6931472
    %v857 = vadd.f32 %v817, %v856
    %v858 = vsub.f32 %v777, %v857
    %vm859 = vcmp.eq.s32.totalorder %v54, 0
    %861 = vrot.lane.b32.xlu0 %v858, 32
    %v862 = vpop.permute.xlu0 %861
    %v864 = vsel %vm859, %v862, 0.0
    %v865 = vadd.f32 %v864, 0.0
    %v866 = vmul.f32 %v858, 1.442695
    %v867 = vpow.pop %v866
    %v868 = vmul.f32 %v867, %v858
    %v869 = vsub.f32 0.0, %v868
    %871 = vrot.lane.b32.xlu0 %v857, 1
    %v872 = vpop.permute.xlu0 %871
    %v874 = vsub.f32 %v786, %v872
    %vm875 = vcmp.eq.s32.totalorder %v54, 1
    %877 = vrot.lane.b32.xlu0 %v874, 31
    %v878 = vpop.permute.xlu0 %877
    %v880 = vsel %vm875, %v878, 0.0
    %v881 = vadd.f32 %v865, %v880
    %v882 = vmul.f32 %v874, 1.442695
    %v883 = vpow.pop %v882
    %v884 = vmul.f32 %v883, %v874
    %886 = vrot.lane.b32.xlu0 %v884, 127
    %v887 = vpop.permute.xlu0 %886
    %v889 = vsub.f32 %v869, %v887
    %890 = vrot.lane.b32.xlu0 %v857, 2
    %v891 = vpop.permute.xlu0 %890
    %v893 = vsub.f32 %v794, %v891
    %vm894 = vcmp.eq.s32.totalorder %v54, 2
    %896 = vrot.lane.b32.xlu0 %v893, 30
    %v897 = vpop.permute.xlu0 %896
    %v899 = vsel %vm894, %v897, 0.0
    %v900 = vadd.f32 %v881, %v899
    %v901 = vmul.f32 %v893, 1.442695
    %v902 = vpow.pop %v901
    %v903 = vmul.f32 %v902, %v893
    %905 = vrot.lane.b32.xlu0 %v903, 126
    %v906 = vpop.permute.xlu0 %905
    %v908 = vsub.f32 %v889, %v906
    %909 = vrot.lane.b32.xlu0 %v857, 3
    %v910 = vpop.permute.xlu0 %909
    %v912 = vsub.f32 %v802, %v910
    %vm913 = vcmp.eq.s32.totalorder %v54, 3
    %915 = vrot.lane.b32.xlu0 %v912, 29
    %v916 = vpop.permute.xlu0 %915
    %v918 = vsel %vm913, %v916, 0.0
    %v919 = vadd.f32 %v900, %v918
    %v920 = vmul.f32 %v912, 1.442695
    %v921 = vpow.pop %v920
    %v922 = vmul.f32 %v921, %v912
    %924 = vrot.lane.b32.xlu0 %v922, 125
    %v925 = vpop.permute.xlu0 %924
    %v927 = vsub.f32 %v908, %v925
    %v928 = vld [vmem:[%s9] sm:$0xff]
    %v929 = vld [vmem:[%s10] sm:$0x1]
    %v930 = vld [vmem:[%s11] sm:$0xf]
    %v931 = vld [vmem:[%s11 + $0x4] sm:$0xf]
    %v932 = vld [vmem:[%s11 + $0x8] sm:$0xf]
    %v933 = vld [vmem:[%s11 + $0xc] sm:$0xf]
    %v934 = vld [vmem:[%s11 + $0x10] sm:$0xf]
    %v935 = vld [vmem:[%s11 + $0x14] sm:$0xf]
    %v936 = vld [vmem:[%s11 + $0x18] sm:$0xf]
    %v937 = vld [vmem:[%s11 + $0x1c] sm:$0xf]
    %v938 = vld [vmem:[%s11 + $0x20] sm:$0xf]
    %v939 = vld [vmem:[%s11 + $0x24] sm:$0xf]
    %v940 = vld [vmem:[%s11 + $0x28] sm:$0xf]
    %v941 = vld [vmem:[%s11 + $0x2c] sm:$0xf]
    %v942 = vld [vmem:[%s11 + $0x30] sm:$0xf]
    %v943 = vld [vmem:[%s11 + $0x34] sm:$0xf]
    %v944 = vld [vmem:[%s11 + $0x38] sm:$0xf]
    %v945 = vld [vmem:[%s11 + $0x3c] sm:$0xf]
    %v946 = vld [vmem:[%s11 + $0x40] sm:$0xf]
    %v947 = vld [vmem:[%s11 + $0x44] sm:$0xf]
    %v948 = vld [vmem:[%s11 + $0x48] sm:$0xf]
    %v949 = vld [vmem:[%s11 + $0x4c] sm:$0xf]
    %v950 = vld [vmem:[%s11 + $0x50] sm:$0xf]
    %v951 = vld [vmem:[%s11 + $0x54] sm:$0xf]
    %v952 = vld [vmem:[%s11 + $0x58] sm:$0xf]
    %v953 = vld [vmem:[%s11 + $0x5c] sm:$0xf]
    %v954 = vld [vmem:[%s11 + $0x60] sm:$0xf]
    %v955 = vld [vmem:[%s11 + $0x64] sm:$0xf]
    %v956 = vld [vmem:[%s11 + $0x68] sm:$0xf]
    %v957 = vld [vmem:[%s11 + $0x6c] sm:$0xf]
    %v958 = vld [vmem:[%s11 + $0x70] sm:$0xf]
    %v959 = vld [vmem:[%s11 + $0x74] sm:$0xf]
    %v960 = vld [vmem:[%s11 + $0x78] sm:$0xf]
    %v961 = vld [vmem:[%s11 + $0x7c] sm:$0xf]
    %v962 = vld [vmem:[%s11 + $0x80] sm:$0xf]
    %v963 = vld [vmem:[%s11 + $0x84] sm:$0xf]
    %v964 = vld [vmem:[%s11 + $0x88] sm:$0xf]
    %v965 = vld [vmem:[%s11 + $0x8c] sm:$0xf]
    %v966 = vld [vmem:[%s11 + $0x90] sm:$0xf]
    %v967 = vld [vmem:[%s11 + $0x94] sm:$0xf]
    %v968 = vld [vmem:[%s11 + $0x98] sm:$0xf]
    %v969 = vld [vmem:[%s11 + $0x9c] sm:$0xf]
    %v970 = vld [vmem:[%s11 + $0xa0] sm:$0xf]
    %v971 = vld [vmem:[%s11 + $0xa4] sm:$0xf]
    %v972 = vld [vmem:[%s11 + $0xa8] sm:$0xf]
    %v973 = vld [vmem:[%s11 + $0xac] sm:$0xf]
    %v974 = vld [vmem:[%s11 + $0xb0] sm:$0xf]
    %v975 = vld [vmem:[%s11 + $0xb4] sm:$0xf]
    %v976 = vld [vmem:[%s11 + $0xb8] sm:$0xf]
    %v977 = vld [vmem:[%s11 + $0xbc] sm:$0xf]
    %v978 = vld [vmem:[%s11 + $0xc0] sm:$0xf]
    %v979 = vld [vmem:[%s11 + $0xc4] sm:$0xf]
    %v980 = vld [vmem:[%s11 + $0xc8] sm:$0xf]
    %v981 = vld [vmem:[%s11 + $0xcc] sm:$0xf]
    %v982 = vld [vmem:[%s11 + $0xd0] sm:$0xf]
    %v983 = vld [vmem:[%s11 + $0xd4] sm:$0xf]
    %v984 = vld [vmem:[%s11 + $0xd8] sm:$0xf]
    %v985 = vld [vmem:[%s11 + $0xdc] sm:$0xf]
    %v986 = vld [vmem:[%s11 + $0xe0] sm:$0xf]
    %v987 = vld [vmem:[%s11 + $0xe4] sm:$0xf]
    %v988 = vld [vmem:[%s11 + $0xe8] sm:$0xf]
    %v989 = vld [vmem:[%s11 + $0xec] sm:$0xf]
    %v990 = vld [vmem:[%s11 + $0xf0] sm:$0xf]
    %v991 = vld [vmem:[%s11 + $0xf4] sm:$0xf]
    %v992 = vld [vmem:[%s11 + $0xf8] sm:$0xf]
    %v993 = vld [vmem:[%s11 + $0xfc] sm:$0xf]
    %v994 = vld [vmem:[%s12] sm:$0xff]
    %v995 = vld [vmem:[%s12 + $0x8] sm:$0xff]
    %v996 = vld [vmem:[%s13] sm:$0xf]
    %v997 = vld [vmem:[%s13 + $0x4] sm:$0xf]
    %v998 = vld [vmem:[%s13 + $0x8] sm:$0xf]
    %v999 = vld [vmem:[%s13 + $0xc] sm:$0xf]
    %v1000 = vld [vmem:[%s14] sm:$0x1]
    %v1002 = vlaneseq
    %v1003 = vshrl.u32 %v1002, 7
    %v1004 = vsub.s32 0, %v1003
    %v1005 = vrot.slane %v929, %v1004
    %1007 = vmatprep.subr.mxu0 0.0
    %1008 = vmatpush1.msra.mxu0 %v928
    %1009 = vmatprep.subr.mxu0 0.0
    %1010 = vmatpush1.msra.mxu0 0.0
    %1011 = vmatprep.subr.mxu0 0.0
    %1012 = vmatpush1.msra.mxu0 0.0
    %1013 = vmatprep.subr.mxu0 0.0
    %1014 = vmatpush1.msra.mxu0 0.0
    %1015 = vmatprep.subr.mxu0 0.0
    %1016 = vmatpush1.msra.mxu0 0.0
    %1017 = vmatprep.subr.mxu0 0.0
    %1018 = vmatpush1.msra.mxu0 0.0
    %1019 = vmatprep.subr.mxu0 0.0
    %1020 = vmatpush1.msra.mxu0 0.0
    %1021 = vmatprep.subr.mxu0 0.0
    %1022 = vmatpush1.msra.mxu0 0.0
    %1023 = vmatprep.subr.mxu0 0.0
    %1024 = vmatpush1.msra.mxu0 0.0
    %1025 = vmatprep.subr.mxu0 0.0
    %1026 = vmatpush1.msra.mxu0 0.0
    %1027 = vmatprep.subr.mxu0 0.0
    %1028 = vmatpush1.msra.mxu0 0.0
    %1029 = vmatprep.subr.mxu0 0.0
    %1030 = vmatpush1.msra.mxu0 0.0
    %1031 = vmatprep.subr.mxu0 0.0
    %1032 = vmatpush1.msra.mxu0 0.0
    %1033 = vmatprep.subr.mxu0 0.0
    %1034 = vmatpush1.msra.mxu0 0.0
    %1035 = vmatprep.subr.mxu0 0.0
    %1036 = vmatpush1.msra.mxu0 0.0
    %1037 = vmatprep.subr.mxu0 0.0
    %1038 = vmatpush1.msra.mxu0 0.0
    %1039 = vmatprep.subr.mxu0 0.0
    %1040 = vmatpush1.msra.mxu0 0.0
    %1041 = vmatprep.subr.mxu0 0.0
    %1042 = vmatpush1.msra.mxu0 0.0
    %1043 = vmatprep.subr.mxu0 0.0
    %1044 = vmatpush1.msra.mxu0 0.0
    %1045 = vmatprep.subr.mxu0 0.0
    %1046 = vmatpush1.msra.mxu0 0.0
    %1047 = vmatprep.subr.mxu0 0.0
    %1048 = vmatpush1.msra.mxu0 0.0
    %1049 = vmatprep.subr.mxu0 0.0
    %1050 = vmatpush1.msra.mxu0 0.0
    %1051 = vmatprep.subr.mxu0 0.0
    %1052 = vmatpush1.msra.mxu0 0.0
    %1053 = vmatprep.subr.mxu0 0.0
    %1054 = vmatpush1.msra.mxu0 0.0
    %1055 = vmatprep.subr.mxu0 0.0
    %1056 = vmatpush1.msra.mxu0 0.0
    %1057 = vmatprep.subr.mxu0 0.0
    %1058 = vmatpush1.msra.mxu0 0.0
    %1059 = vmatprep.subr.mxu0 0.0
    %1060 = vmatpush1.msra.mxu0 0.0
    %1061 = vmatprep.subr.mxu0 0.0
    %1062 = vmatpush1.msra.mxu0 0.0
    %1063 = vmatprep.subr.mxu0 0.0
    %1064 = vmatpush1.msra.mxu0 0.0
    %1065 = vmatprep.subr.mxu0 0.0
    %1066 = vmatpush1.msra.mxu0 0.0
    %1067 = vmatprep.subr.mxu0 0.0
    %1068 = vmatpush1.msra.mxu0 0.0
    %1069 = vmatprep.subr.mxu0 0.0
    %1070 = vmatpush1.msra.mxu0 0.0
    %1071 = vmatprep.mubr.f32.mxu0 0.0
    %1072 = vmatmul.mubr.f32.gmra.mrb[0].mxu0 %v136
    %v1073 = vpop.f32.mrb[0].mxu0
    %v1074 = vadd.f32 %v1005, %v1073
    %v1075 = vpop.f32.mrb[0].mxu0
    %1076 = vdwg.mxu0
    %v1077 = vmax.f32 %v1074, 0.0
    %v1078 = vmul.f32 %v212, %v1077
    %v1079 = vmul.f32 %v217, %v1077
    %v1080 = vmul.f32 %v222, %v1077
    %v1081 = vmul.f32 %v227, %v1077
    %v1082 = vmul.f32 %v232, %v1077
    %v1083 = vmul.f32 %v237, %v1077
    %v1084 = vmul.f32 %v242, %v1077
    %v1085 = vmul.f32 %v247, %v1077
    %v1086 = vmul.f32 %v252, %v1077
    %v1087 = vmul.f32 %v257, %v1077
    %v1088 = vmul.f32 %v262, %v1077
    %v1089 = vmul.f32 %v267, %v1077
    %v1090 = vmul.f32 %v272, %v1077
    %v1091 = vmul.f32 %v277, %v1077
    %v1092 = vmul.f32 %v282, %v1077
    %v1093 = vmul.f32 %v287, %v1077
    %1095 = vrot.lane.b32.xlu0 %v1079, 32
    %v1096 = vpop.permute.xlu0 %1095
    %1099 = vrot.lane.b32.xlu0 %v1080, 64
    %v1100 = vpop.permute.xlu0 %1099
    %1103 = vrot.lane.b32.xlu0 %v1081, 96
    %v1104 = vpop.permute.xlu0 %1103
    %1107 = vrot.lane.b32.xlu0 %v1083, 32
    %v1108 = vpop.permute.xlu0 %1107
    %1111 = vrot.lane.b32.xlu0 %v1084, 64
    %v1112 = vpop.permute.xlu0 %1111
    %1115 = vrot.lane.b32.xlu0 %v1085, 96
    %v1116 = vpop.permute.xlu0 %1115
    %1119 = vrot.lane.b32.xlu0 %v1087, 32
    %v1120 = vpop.permute.xlu0 %1119
    %1123 = vrot.lane.b32.xlu0 %v1088, 64
    %v1124 = vpop.permute.xlu0 %1123
    %1127 = vrot.lane.b32.xlu0 %v1089, 96
    %v1128 = vpop.permute.xlu0 %1127
    %1131 = vrot.lane.b32.xlu0 %v1091, 32
    %v1132 = vpop.permute.xlu0 %1131
    %1135 = vrot.lane.b32.xlu0 %v1092, 64
    %v1136 = vpop.permute.xlu0 %1135
    %1139 = vrot.lane.b32.xlu0 %v1093, 96
    %v1140 = vpop.permute.xlu0 %1139
    %v1142 = vsel %vm338, %v1078, %v1096
    %v1143 = vsel %vm340, %v1142, %v1100
    %v1144 = vsel %vm342, %v1143, %v1104
    %v1145 = vsel %vm338, %v1082, %v1108
    %v1146 = vsel %vm340, %v1145, %v1112
    %v1147 = vsel %vm342, %v1146, %v1116
    %v1148 = vsel %vm338, %v1086, %v1120
    %v1149 = vsel %vm340, %v1148, %v1124
    %v1150 = vsel %vm342, %v1149, %v1128
    %v1151 = vsel %vm338, %v1090, %v1132
    %v1152 = vsel %vm340, %v1151, %v1136
    %v1153 = vsel %vm342, %v1152, %v1140
    %v1154 = vpack.c.bf16 %v1144, %v1144
    %v1155 = vpack.c.bf16 %v1147, %v1147
    %v1156 = vpack.c.bf16 %v1150, %v1150
    %v1157 = vpack.c.bf16 %v1153, %v1153
    %1158 = vmatprep.subr.mxu0 0.0
    %1159 = vmatpush1.msra.mxu0 %v994
    %1160 = vmatprep.subr.mxu0 0.0
    %1161 = vmatpush1.msra.mxu0 %v995
    %1162 = vmatprep.subr.mxu0 0.0
    %1163 = vmatpush1.msra.mxu0 0.0
    %1164 = vmatprep.subr.mxu0 0.0
    %1165 = vmatpush1.msra.mxu0 0.0
    %1166 = vmatprep.subr.mxu0 0.0
    %1167 = vmatpush1.msra.mxu0 0.0
    %1168 = vmatprep.subr.mxu0 0.0
    %1169 = vmatpush1.msra.mxu0 0.0
    %1170 = vmatprep.subr.mxu0 0.0
    %1171 = vmatpush1.msra.mxu0 0.0
    %1172 = vmatprep.subr.mxu0 0.0
    %1173 = vmatpush1.msra.mxu0 0.0
    %1174 = vmatprep.subr.mxu0 0.0
    %1175 = vmatpush1.msra.mxu0 0.0
    %1176 = vmatprep.subr.mxu0 0.0
    %1177 = vmatpush1.msra.mxu0 0.0
    %1178 = vmatprep.subr.mxu0 0.0
    %1179 = vmatpush1.msra.mxu0 0.0
    %1180 = vmatprep.subr.mxu0 0.0
    %1181 = vmatpush1.msra.mxu0 0.0
    %1182 = vmatprep.subr.mxu0 0.0
    %1183 = vmatpush1.msra.mxu0 0.0
    %1184 = vmatprep.subr.mxu0 0.0
    %1185 = vmatpush1.msra.mxu0 0.0
    %1186 = vmatprep.subr.mxu0 0.0
    %1187 = vmatpush1.msra.mxu0 0.0
    %1188 = vmatprep.subr.mxu0 0.0
    %1189 = vmatpush1.msra.mxu0 0.0
    %1190 = vmatprep.subr.mxu0 0.0
    %1191 = vmatpush1.msra.mxu0 0.0
    %1192 = vmatprep.subr.mxu0 0.0
    %1193 = vmatpush1.msra.mxu0 0.0
    %1194 = vmatprep.subr.mxu0 0.0
    %1195 = vmatpush1.msra.mxu0 0.0
    %1196 = vmatprep.subr.mxu0 0.0
    %1197 = vmatpush1.msra.mxu0 0.0
    %1198 = vmatprep.subr.mxu0 0.0
    %1199 = vmatpush1.msra.mxu0 0.0
    %1200 = vmatprep.subr.mxu0 0.0
    %1201 = vmatpush1.msra.mxu0 0.0
    %1202 = vmatprep.subr.mxu0 0.0
    %1203 = vmatpush1.msra.mxu0 0.0
    %1204 = vmatprep.subr.mxu0 0.0
    %1205 = vmatpush1.msra.mxu0 0.0
    %1206 = vmatprep.subr.mxu0 0.0
    %1207 = vmatpush1.msra.mxu0 0.0
    %1208 = vmatprep.subr.mxu0 0.0
    %1209 = vmatpush1.msra.mxu0 0.0
    %1210 = vmatprep.subr.mxu0 0.0
    %1211 = vmatpush1.msra.mxu0 0.0
    %1212 = vmatprep.subr.mxu0 0.0
    %1213 = vmatpush1.msra.mxu0 0.0
    %1214 = vmatprep.subr.mxu0 0.0
    %1215 = vmatpush1.msra.mxu0 0.0
    %1216 = vmatprep.subr.mxu0 0.0
    %1217 = vmatpush1.msra.mxu0 0.0
    %1218 = vmatprep.subr.mxu0 0.0
    %1219 = vmatpush1.msra.mxu0 0.0
    %1220 = vmatprep.subr.mxu0 0.0
    %1221 = vmatpush1.msra.mxu0 0.0
    %1222 = vmatprep.mubr.f32.mxu0 0.0
    %1223 = vmatmul.mubr.f32.gmra.mrb[0].mxu0 %v358
    %v1224 = vpop.f32.mrb[0].mxu0
    %v1225 = vadd.f32 0.0, %v1224
    %v1226 = vpop.f32.mrb[0].mxu0
    %1227 = vdwg.mxu0
    %v1292 = vunpack.c.l.b16 %v930
    %v1293 = vunpack.c.l.b16 %v931
    %v1294 = vunpack.c.l.b16 %v932
    %v1295 = vunpack.c.l.b16 %v933
    %v1296 = vunpack.c.l.b16 %v934
    %v1297 = vunpack.c.l.b16 %v935
    %v1298 = vunpack.c.l.b16 %v936
    %v1299 = vunpack.c.l.b16 %v937
    %v1300 = vunpack.c.l.b16 %v938
    %v1301 = vunpack.c.l.b16 %v939
    %v1302 = vunpack.c.l.b16 %v940
    %v1303 = vunpack.c.l.b16 %v941
    %v1304 = vunpack.c.l.b16 %v942
    %v1305 = vunpack.c.l.b16 %v943
    %v1306 = vunpack.c.l.b16 %v944
    %v1307 = vunpack.c.l.b16 %v945
    %v1308 = vunpack.c.l.b16 %v946
    %v1309 = vunpack.c.l.b16 %v947
    %v1310 = vunpack.c.l.b16 %v948
    %v1311 = vunpack.c.l.b16 %v949
    %v1312 = vunpack.c.l.b16 %v950
    %v1313 = vunpack.c.l.b16 %v951
    %v1314 = vunpack.c.l.b16 %v952
    %v1315 = vunpack.c.l.b16 %v953
    %v1316 = vunpack.c.l.b16 %v954
    %v1317 = vunpack.c.l.b16 %v955
    %v1318 = vunpack.c.l.b16 %v956
    %v1319 = vunpack.c.l.b16 %v957
    %v1320 = vunpack.c.l.b16 %v958
    %v1321 = vunpack.c.l.b16 %v959
    %v1322 = vunpack.c.l.b16 %v960
    %v1323 = vunpack.c.l.b16 %v961
    %v1324 = vunpack.c.l.b16 %v962
    %v1325 = vunpack.c.l.b16 %v963
    %v1326 = vunpack.c.l.b16 %v964
    %v1327 = vunpack.c.l.b16 %v965
    %v1328 = vunpack.c.l.b16 %v966
    %v1329 = vunpack.c.l.b16 %v967
    %v1330 = vunpack.c.l.b16 %v968
    %v1331 = vunpack.c.l.b16 %v969
    %v1332 = vunpack.c.l.b16 %v970
    %v1333 = vunpack.c.l.b16 %v971
    %v1334 = vunpack.c.l.b16 %v972
    %v1335 = vunpack.c.l.b16 %v973
    %v1336 = vunpack.c.l.b16 %v974
    %v1337 = vunpack.c.l.b16 %v975
    %v1338 = vunpack.c.l.b16 %v976
    %v1339 = vunpack.c.l.b16 %v977
    %v1340 = vunpack.c.l.b16 %v978
    %v1341 = vunpack.c.l.b16 %v979
    %v1342 = vunpack.c.l.b16 %v980
    %v1343 = vunpack.c.l.b16 %v981
    %v1344 = vunpack.c.l.b16 %v982
    %v1345 = vunpack.c.l.b16 %v983
    %v1346 = vunpack.c.l.b16 %v984
    %v1347 = vunpack.c.l.b16 %v985
    %v1348 = vunpack.c.l.b16 %v986
    %v1349 = vunpack.c.l.b16 %v987
    %v1350 = vunpack.c.l.b16 %v988
    %v1351 = vunpack.c.l.b16 %v989
    %v1352 = vunpack.c.l.b16 %v990
    %v1353 = vunpack.c.l.b16 %v991
    %v1354 = vunpack.c.l.b16 %v992
    %v1355 = vunpack.c.l.b16 %v993
    %v1356 = vpack.c.b16 %v1293, %v1292
    %v1357 = vpack.c.b16 %v1295, %v1294
    %v1358 = vpack.c.b16 %v1297, %v1296
    %v1359 = vpack.c.b16 %v1299, %v1298
    %v1360 = vpack.c.b16 %v1301, %v1300
    %v1361 = vpack.c.b16 %v1303, %v1302
    %v1362 = vpack.c.b16 %v1305, %v1304
    %v1363 = vpack.c.b16 %v1307, %v1306
    %v1364 = vpack.c.b16 %v1309, %v1308
    %v1365 = vpack.c.b16 %v1311, %v1310
    %v1366 = vpack.c.b16 %v1313, %v1312
    %v1367 = vpack.c.b16 %v1315, %v1314
    %v1368 = vpack.c.b16 %v1317, %v1316
    %v1369 = vpack.c.b16 %v1319, %v1318
    %v1370 = vpack.c.b16 %v1321, %v1320
    %v1371 = vpack.c.b16 %v1323, %v1322
    %v1372 = vpack.c.b16 %v1325, %v1324
    %v1373 = vpack.c.b16 %v1327, %v1326
    %v1374 = vpack.c.b16 %v1329, %v1328
    %v1375 = vpack.c.b16 %v1331, %v1330
    %v1376 = vpack.c.b16 %v1333, %v1332
    %v1377 = vpack.c.b16 %v1335, %v1334
    %v1378 = vpack.c.b16 %v1337, %v1336
    %v1379 = vpack.c.b16 %v1339, %v1338
    %v1380 = vpack.c.b16 %v1341, %v1340
    %v1381 = vpack.c.b16 %v1343, %v1342
    %v1382 = vpack.c.b16 %v1345, %v1344
    %v1383 = vpack.c.b16 %v1347, %v1346
    %v1384 = vpack.c.b16 %v1349, %v1348
    %v1385 = vpack.c.b16 %v1351, %v1350
    %v1386 = vpack.c.b16 %v1353, %v1352
    %v1387 = vpack.c.b16 %v1355, %v1354
    %1420 = vmatprep.subr.bf16.mxu0 0
    %1421 = vmatpush1.bf16.msra.mxu0 %v1356
    %1422 = vmatprep.subr.bf16.mxu0 0
    %1423 = vmatpush1.bf16.msra.mxu0 %v1357
    %1424 = vmatprep.subr.bf16.mxu0 0
    %1425 = vmatpush1.bf16.msra.mxu0 %v1358
    %1426 = vmatprep.subr.bf16.mxu0 0
    %1427 = vmatpush1.bf16.msra.mxu0 %v1359
    %1428 = vmatprep.subr.bf16.mxu0 0
    %1429 = vmatpush1.bf16.msra.mxu0 %v1360
    %1430 = vmatprep.subr.bf16.mxu0 0
    %1431 = vmatpush1.bf16.msra.mxu0 %v1361
    %1432 = vmatprep.subr.bf16.mxu0 0
    %1433 = vmatpush1.bf16.msra.mxu0 %v1362
    %1434 = vmatprep.subr.bf16.mxu0 0
    %1435 = vmatpush1.bf16.msra.mxu0 %v1363
    %1436 = vmatprep.subr.bf16.mxu0 0
    %1437 = vmatpush1.bf16.msra.mxu0 %v1364
    %1438 = vmatprep.subr.bf16.mxu0 0
    %1439 = vmatpush1.bf16.msra.mxu0 %v1365
    %1440 = vmatprep.subr.bf16.mxu0 0
    %1441 = vmatpush1.bf16.msra.mxu0 %v1366
    %1442 = vmatprep.subr.bf16.mxu0 0
    %1443 = vmatpush1.bf16.msra.mxu0 %v1367
    %1444 = vmatprep.subr.bf16.mxu0 0
    %1445 = vmatpush1.bf16.msra.mxu0 %v1368
    %1446 = vmatprep.subr.bf16.mxu0 0
    %1447 = vmatpush1.bf16.msra.mxu0 %v1369
    %1448 = vmatprep.subr.bf16.mxu0 0
    %1449 = vmatpush1.bf16.msra.mxu0 %v1370
    %1450 = vmatprep.subr.bf16.mxu0 0
    %1451 = vmatpush1.bf16.msra.mxu0 %v1371
    %1452 = vmatprep.mubr.bf16.mxu0 %v1155
    %1453 = vmatmul.mubr.bf16.gmra.mrb[0].mxu0 %v1154
    %v1454 = vpop.f32.mrb[0].mxu0
    %v1455 = vadd.f32 %v1225, %v1454
    %v1456 = vpop.f32.mrb[0].mxu0
    %v1457 = vpop.f32.mrb[0].mxu0
    %v1458 = vpop.f32.mrb[0].mxu0
    %1459 = vdwg.mxu0
    %1460 = vmatprep.subr.bf16.mxu0 0
    %1461 = vmatpush1.bf16.msra.mxu0 %v1372
    %1462 = vmatprep.subr.bf16.mxu0 0
    %1463 = vmatpush1.bf16.msra.mxu0 %v1373
    %1464 = vmatprep.subr.bf16.mxu0 0
    %1465 = vmatpush1.bf16.msra.mxu0 %v1374
    %1466 = vmatprep.subr.bf16.mxu0 0
    %1467 = vmatpush1.bf16.msra.mxu0 %v1375
    %1468 = vmatprep.subr.bf16.mxu0 0
    %1469 = vmatpush1.bf16.msra.mxu0 %v1376
    %1470 = vmatprep.subr.bf16.mxu0 0
    %1471 = vmatpush1.bf16.msra.mxu0 %v1377
    %1472 = vmatprep.subr.bf16.mxu0 0
    %1473 = vmatpush1.bf16.msra.mxu0 %v1378
    %1474 = vmatprep.subr.bf16.mxu0 0
    %1475 = vmatpush1.bf16.msra.mxu0 %v1379
    %1476 = vmatprep.subr.bf16.mxu0 0
    %1477 = vmatpush1.bf16.msra.mxu0 %v1380
    %1478 = vmatprep.subr.bf16.mxu0 0
    %1479 = vmatpush1.bf16.msra.mxu0 %v1381
    %1480 = vmatprep.subr.bf16.mxu0 0
    %1481 = vmatpush1.bf16.msra.mxu0 %v1382
    %1482 = vmatprep.subr.bf16.mxu0 0
    %1483 = vmatpush1.bf16.msra.mxu0 %v1383
    %1484 = vmatprep.subr.bf16.mxu0 0
    %1485 = vmatpush1.bf16.msra.mxu0 %v1384
    %1486 = vmatprep.subr.bf16.mxu0 0
    %1487 = vmatpush1.bf16.msra.mxu0 %v1385
    %1488 = vmatprep.subr.bf16.mxu0 0
    %1489 = vmatpush1.bf16.msra.mxu0 %v1386
    %1490 = vmatprep.subr.bf16.mxu0 0
    %1491 = vmatpush1.bf16.msra.mxu0 %v1387
    %1492 = vmatprep.mubr.bf16.mxu0 %v1157
    %1493 = vmatmul.mubr.bf16.gmra.mrb[0].mxu0 %v1156
    %v1494 = vpop.f32.mrb[0].mxu0
    %v1495 = vadd.f32 %v1455, %v1494
    %v1496 = vpop.f32.mrb[0].mxu0
    %v1497 = vpop.f32.mrb[0].mxu0
    %v1498 = vpop.f32.mrb[0].mxu0
    %1499 = vdwg.mxu0
    %1501 = vrot.lane.b32.xlu0 %v1074, 64
    %v1502 = vpop.permute.xlu0 %1501
    %v1504 = vadd.f32 %v1495, %v1502
    %v1505 = vmax.f32 %v1504, 0.0
    %v1506 = vpack.c.bf16 %v1077, %v1077
    %v1508 = vlaneseq
    %v1509 = vshrl.u32 %v1508, 7
    %v1510 = vsub.s32 0, %v1509
    %v1511 = vrot.slane %v1000, %v1510
    %1514 = vrot.lane.b32.xlu0 %v1506, 96
    %v1515 = vpop.permute.xlu0 %1514
    %v1520 = vunpack.c.l.b16 %v996
    %v1521 = vunpack.c.l.b16 %v997
    %v1522 = vunpack.c.l.b16 %v998
    %v1523 = vunpack.c.l.b16 %v999
    %v1524 = vpack.c.b16 %v1521, %v1520
    %v1525 = vpack.c.b16 %v1523, %v1522
    %v1529 = vsel %vm338, %v1515, 0
    %1531 = vmatprep.subr.bf16.mxu0 0
    %1532 = vmatpush1.bf16.msra.mxu0 %v1524
    %1533 = vmatprep.subr.bf16.mxu0 0
    %1534 = vmatpush1.bf16.msra.mxu0 %v1525
    %1535 = vmatprep.subr.bf16.mxu0 0
    %1536 = vmatpush1.bf16.msra.mxu0 0
    %1537 = vmatprep.subr.bf16.mxu0 0
    %1538 = vmatpush1.bf16.msra.mxu0 0
    %1539 = vmatprep.subr.bf16.mxu0 0
    %1540 = vmatpush1.bf16.msra.mxu0 0
    %1541 = vmatprep.subr.bf16.mxu0 0
    %1542 = vmatpush1.bf16.msra.mxu0 0
    %1543 = vmatprep.subr.bf16.mxu0 0
    %1544 = vmatpush1.bf16.msra.mxu0 0
    %1545 = vmatprep.subr.bf16.mxu0 0
    %1546 = vmatpush1.bf16.msra.mxu0 0
    %1547 = vmatprep.subr.bf16.mxu0 0
    %1548 = vmatpush1.bf16.msra.mxu0 0
    %1549 = vmatprep.subr.bf16.mxu0 0
    %1550 = vmatpush1.bf16.msra.mxu0 0
    %1551 = vmatprep.subr.bf16.mxu0 0
    %1552 = vmatpush1.bf16.msra.mxu0 0
    %1553 = vmatprep.subr.bf16.mxu0 0
    %1554 = vmatpush1.bf16.msra.mxu0 0
    %1555 = vmatprep.subr.bf16.mxu0 0
    %1556 = vmatpush1.bf16.msra.mxu0 0
    %1557 = vmatprep.subr.bf16.mxu0 0
    %1558 = vmatpush1.bf16.msra.mxu0 0
    %1559 = vmatprep.subr.bf16.mxu0 0
    %1560 = vmatpush1.bf16.msra.mxu0 0
    %1561 = vmatprep.subr.bf16.mxu0 0
    %1562 = vmatpush1.bf16.msra.mxu0 0
    %1563 = vmatprep.mubr.bf16.mxu0 0
    %1564 = vmatmul.mubr.bf16.gmra.mrb[0].mxu0 %v1529
    %v1565 = vpop.f32.mrb[0].mxu0
    %v1566 = vadd.f32 %v1511, %v1565
    %v1567 = vpop.f32.mrb[0].mxu0
    %v1568 = vpop.f32.mrb[0].mxu0
    %v1569 = vpop.f32.mrb[0].mxu0
    %1570 = vdwg.mxu0
    %v1571 = vmul.f32 %v1505, %v1566
    %v1572 = vsel %vm338, %v1571, 0.0
    %1573 = vadd.xlane.f32.xlu0 %v1572
    %v1574 = vpop.xlane.xlu0 %1573
    %v1575 = vadd.f32 %v1574, %v1074
    %v1576 = vlaneseq
    %v1577 = vand.u32 %v1576, 127
    %vm1578 = vcmp.eq.s32.totalorder %v1577, 0
    %1580 = vset.pattern.permute.xlu0 0
    %1581 = vperm.xlu0 %1580, %v919
    %v1582 = vpop.permute.xlu0 %1581
    %v1584 = vsel %vm1578, %v1582, 0.0
    %vm1585 = vcmp.eq.s32.totalorder %v1577, 1
    %1587 = vset.pattern.permute.xlu0 96
    %1588 = vperm.xlu0 %1587, %v1575
    %v1589 = vpop.permute.xlu0 %1588
    %v1591 = vsel %vm1585, %v1589, %v1584
    %vm1592 = vcmp.eq.s32.totalorder %v1577, 2
    %1594 = vset.pattern.permute.xlu0 96
    %1595 = vperm.xlu0 %1594, %v927
    %v1596 = vpop.permute.xlu0 %1595
    %v1598 = vsel %vm1592, %v1596, %v1591
    %1599 = vst [vmem:[#allocation2] sm:$0xff] %v1598
    // Predicated region
    $region62: #{tpu_custom_call.1} parent=1 // pred_check
      _
    $region63: #{tpu_custom_call.1} parent=1 // pred_check_branch
      %1601 = sbr.rel (0) target = $region65
    $region64: #{tpu_custom_call.1} parent=1 // pred_region
      %s1603 = ssub.s32 128, 128
      %1604 = vsyncadd [#allocation3], %s1603
      %s1606 = sshll.u32 [#allocation2], 4
      %s1607 = int_to_ptr.vmem [resolvable:$true] %s1606
      %1609 = dma.vmem_to_hbm [thread:$0]  %s1607, 128, %s15, [#allocation3]
    $region65: #{tpu_custom_call.1} parent=1 // pred_fallthru
      _
    // Predicated region
    $region66: #{tpu_custom_call.1} parent=1 // pred_check
      _
    $region67: #{tpu_custom_call.1} parent=1 // pred_check_branch
      %1611 = sbr.rel (0) target = $region69
    $region68: #{tpu_custom_call.1} parent=1 // pred_region
      %1612 = dma.done [#allocation3], 128
    $region69: #{tpu_custom_call.1} parent=1 // pred_fallthru
      _
    %1613 = vsyncpa [#allocation3], 1

</llo_original>
